<compile_context>
chip_gen: v5e
topology: v5e:2x2
jax: 0.10.0
libtpu: 0.0.40
codegen_flags: <defaults>
</compile_context>

<pallas_src>
import functools

import jax
import jax.numpy as jnp
from jax.experimental import pallas as pl
from jax.experimental.pallas import tpu as pltpu

_VMEM = pl.BlockSpec(memory_space=pltpu.MemorySpace.VMEM)
_KH = _KW = 5  # conv spatial kernel


# ----------------------------------------------------------------------------
# Fused kernel: conv(as GEMM)+BN+ReLU+MaxPool+mean  ||  2-layer LSTM  ||  MLP
# ----------------------------------------------------------------------------
def _stacn_fused_kernel(act_ref, w_ref, s_ref, out_ref, *,
                        batch, cells, hidden, seq_len, cnn_out):
    B, H, C = batch, hidden, cnn_out
    f32, bf16 = jnp.float32, jnp.bfloat16
    n_patch = 4 * B * cells

    # Static row offsets into the packed bf16 weight buffer (all 16-aligned).
    o_conv = 0                  # (128, C)    conv weight, K padded 100 -> 128
    o_ih0 = 128                 # (128, 4H)   LSTM layer-0 input proj, K padded
    o_hh0 = 256                 # (H,   4H)   LSTM layer-0 recurrent
    o_w12 = o_hh0 + H           # (2H,  4H)   [w_ih1.T ; w_hh1.T] stacked
    o_f1n = o_hh0 + 3 * H       # (C,   128)  fc1, news half
    o_f1s = o_f1n + C           # (H,   128)  fc1, stock half
    o_fc2 = o_f1s + H           # (128, 128)  fc2, N padded 64 -> 128

    # Small packed params (a single (8,128) vreg worth of data).
    bn_scale = s_ref[0:1, :]    # gamma/sqrt(var+eps) / cells
    bn_shift = s_ref[1:2, :]    # (scale*(conv_b-mean)+beta) / cells
    b0 = s_ref[2:3, :]
    b1 = s_ref[3:4, :]
    fc1_b = s_ref[4:5, :]
    fc2_b = s_ref[5:6, :]       # zero past column 64
    fc3_w = s_ref[6:7, :]       # zero past column 64
    fc3_b = s_ref[7:8, 0:1]

    # ---- CNN branch: conv GEMM + folded BN(eval)+bias + ReLU + MaxPool + mean
    conv = jnp.dot(act_ref[0:n_patch, :], w_ref[o_conv:o_conv + 128, :],
                   preferred_element_type=f32)               # (4*B*cells, C)
    y = jnp.maximum(conv * bn_scale + bn_shift, 0.0)
    # rows are ordered (pool_pos, b, hp, wp): MaxPool3d((1,2,2)) = max over axis 0
    pooled = jnp.max(y.reshape(4, B * cells, C), axis=0)
    # torch.mean over (T, H, W); the 1/cells factor is pre-folded into the BN
    x_news = jnp.sum(pooled.reshape(B, cells, C), axis=1)     # (B, C) f32

    # ---- LSTM branch (2 layers, batch_first, inference) ----
    # layer-0 input projection hoisted out of the recurrence (bias pre-folded)
    x_proj = (jnp.dot(act_ref[n_patch:n_patch + seq_len * B, :],
                      w_ref[o_ih0:o_ih0 + 128, :],
                      preferred_element_type=f32)
              + b0).reshape(seq_len, B, 4 * H)
    whh0 = w_ref[o_hh0:o_hh0 + H, :]
    w12 = w_ref[o_w12:o_w12 + 2 * H, :]

    def lstm_cell(pre, c):
        # two full-width transcendentals instead of four quarter-lane ones
        sig = jax.nn.sigmoid(pre)
        tg = jnp.tanh(pre)
        i, f = sig[:, 0:H], sig[:, H:2 * H]
        g, o = tg[:, 2 * H:3 * H], sig[:, 3 * H:4 * H]
        c_new = f * c + i * g
        return o * jnp.tanh(c_new), c_new

    h1 = jnp.zeros((B, H), f32)
    c1 = jnp.zeros((B, H), f32)
    h2 = jnp.zeros((B, H), f32)
    c2 = jnp.zeros((B, H), f32)
    # TODO(synk): Mosaic may re-push whh0 / w12 to the MXU every unrolled step;
    # pinning them resident via pltpu.matmul_push_rhs/_acc_lhs/_pop would
    # shorten the serial chain further but is left out for robustness.
    for t in range(seq_len):     # static trip count -> fully unrolled recurrence
        pre1 = x_proj[t] + jnp.dot(h1.astype(bf16), whh0,
                                   preferred_element_type=f32)
        h1, c1 = lstm_cell(pre1, c1)
        # layer-2: single stacked matmul (w_ih1 | w_hh1 concatenated on K).
        # TODO(synk): inter-layer LSTM dropout is identity (inference semantics).
        h12 = jnp.concatenate([h1, h2], axis=1).astype(bf16)   # (B, 2H)
        pre2 = jnp.dot(h12, w12, preferred_element_type=f32) + b1
        h2, c2 = lstm_cell(pre2, c2)
    x_stock = h2                                               # (B, H) f32

    # ---- FC head: fc1 split over the two branches (no concat), ReLU, fc2, fc3
    h = jnp.maximum(
        jnp.dot(x_news.astype(bf16), w_ref[o_f1n:o_f1n + C, :],
                preferred_element_type=f32)
        + jnp.dot(x_stock.astype(bf16), w_ref[o_f1s:o_f1s + H, :],
                  preferred_element_type=f32)
        + fc1_b, 0.0)
    h = jnp.maximum(
        jnp.dot(h.astype(bf16), w_ref[o_fc2:o_fc2 + 128, :],
                preferred_element_type=f32)
        + fc2_b, 0.0)
    # fc3 (64 -> 1, zero-padded to 128) as a lane reduction, not an N=1 matmul
    out_ref[...] = jnp.sum(h * fc3_w, axis=-1, keepdims=True) + fc3_b


# ----------------------------------------------------------------------------
# Parameter init (deterministic, synthetic) -- torch-shaped parameters
# ----------------------------------------------------------------------------
def init_params(key, input_size=4, hidden_size=32, cnn_out_channels=128):
    ks = jax.random.split(key, 20)
    n = lambda k, shape, s=0.05: s * jax.random.normal(k, shape, jnp.float32)
    H = hidden_size
    p = {}
    p["conv_w"] = n(ks[0], (cnn_out_channels, 4, 3, 5, 5))
    p["conv_b"] = n(ks[1], (cnn_out_channels,))
    p["bn_gamma"] = 1.0 + 0.1 * jax.random.normal(ks[2], (cnn_out_channels,))
    p["bn_beta"] = n(ks[3], (cnn_out_channels,))
    p["bn_mean"] = n(ks[4], (cnn_out_channels,))
    p["bn_var"] = jnp.abs(1.0 + 0.1 * jax.random.normal(ks[5],
                                                        (cnn_out_channels,)))
    p["w_ih0"] = n(ks[6], (4 * H, input_size), 0.1)
    p["w_hh0"] = n(ks[7], (4 * H, H), 0.1)
    p["b_ih0"] = n(ks[8], (4 * H,), 0.1)
    p["b_hh0"] = n(ks[9], (4 * H,), 0.1)
    p["w_ih1"] = n(ks[10], (4 * H, H), 0.1)
    p["w_hh1"] = n(ks[11], (4 * H, H), 0.1)
    p["b_ih1"] = n(ks[12], (4 * H,), 0.1)
    p["b_hh1"] = n(ks[13], (4 * H,), 0.1)
    p["fc1_w"] = n(ks[14], (128, cnn_out_channels + H), 0.1)
    p["fc1_b"] = n(ks[15], (128,), 0.1)
    p["fc2_w"] = n(ks[16], (64, 128), 0.1)
    p["fc2_b"] = n(ks[17], (64,), 0.1)
    p["fc3_w"] = n(ks[18], (1, 64), 0.1)
    p["fc3_b"] = n(ks[19], (1,), 0.1)
    return p


# ----------------------------------------------------------------------------
# One-time parameter re-layout / folding / packing / bf16 cast (outside jit)
# ----------------------------------------------------------------------------
def preprocess_params(params, *, input_size=4, hidden_size=32,
                      cnn_out_channels=128, input_hw=(16, 16), eps=1e-5):
    H, C = hidden_size, cnn_out_channels
    # TODO(synk): the packed 128-lane layout assumes 4*hidden == cnn_out == 128;
    # other widths need a different lane/tile layout.
    assert 4 * H == 128 and C == 128, "packing assumes 4*hidden == cnn_out == 128"
    Hin, Win = input_hw
    Ho = Hin                                   # conv: k=5, stride 1, pad 2 on H
    Wo = (Win + 2 * 2 - _KW) // 2 + 1          # conv: k=5, stride 2, pad 2 on W
    cells = (Ho // 2) * (Wo // 2)              # MaxPool3d((1,2,2)), T == 1

    # Conv3d weight: with T==1 and pad=1 on T only the kt=1 plane ever sees
    # real data, so drop the two all-zero temporal planes (K: 300 -> 100) and
    # zero-pad K to 128 for a tile-aligned GEMM.
    w2d = params["conv_w"][:, :, 1, :, :]                       # (Cout, Cin, 5, 5)
    w_conv = jnp.transpose(w2d, (2, 3, 1, 0)).reshape(-1, C)    # (25*Cin, Cout)
    assert w_conv.shape[0] <= 128
    w_conv = jnp.pad(w_conv, ((0, 128 - w_conv.shape[0]), (0, 0)))
    # Fold conv bias + BatchNorm3d(eval) + the 1/cells of the spatial mean
    # (valid: 1/cells > 0 commutes with ReLU, max-pool and the final sum).
    s0 = params["bn_gamma"] / jnp.sqrt(params["bn_var"] + eps)
    bn_scale = (s0 / cells).reshape(1, -1)
    bn_shift = ((s0 * (params["conv_b"] - params["bn_mean"]) + params["bn_beta"])
                / cells).reshape(1, -1)

    # LSTM: layer-0 input proj K padded to 128 (x_seq is zero-padded to match),
    # layer-1 input+recurrent weights stacked -> one matmul per recurrence step.
    w_ih0 = jnp.pad(params["w_ih0"].T, ((0, 128 - input_size), (0, 0)))
    w_hh0 = params["w_hh0"].T                                   # (H, 4H)
    w12 = jnp.concatenate([params["w_ih1"].T, params["w_hh1"].T], axis=0)

    # FC head: fc1 split into news/stock halves (removes the concat); fc2
    # output zero-padded 64 -> 128 so the whole head stays lane-dense.
    fc1_wT = params["fc1_w"].T                                  # (C + H, 128)
    fc2_w = jnp.pad(params["fc2_w"].T, ((0, 0), (0, 64)))       # (128, 128)

    w_pack = jnp.concatenate(
        [w_conv, w_ih0, w_hh0, w12, fc1_wT[:C], fc1_wT[C:], fc2_w],
        axis=0).astype(jnp.bfloat16)                            # (640, 128)

    row128 = lambda v: jnp.pad(jnp.ravel(v).reshape(1, -1),
                               ((0, 0), (0, 128 - v.size))).astype(jnp.float32)
    s_pack = jnp.concatenate([
        bn_scale, bn_shift,
        (params["b_ih0"] + params["b_hh0"]).reshape(1, -1),
        (params["b_ih1"] + params["b_hh1"]).reshape(1, -1),
        params["fc1_b"].reshape(1, -1),
        row128(params["fc2_b"]), row128(params["fc3_w"]), row128(params["fc3_b"]),
    ], axis=0).astype(jnp.float32)                              # (8, 128)

    return {"w_pack": w_pack, "s_pack": s_pack}


# ----------------------------------------------------------------------------
# Forward pass
# ----------------------------------------------------------------------------
def stacn_forward(prepped, thought_vectors, stock_features, *,
                  hidden_size=32, cnn_out_channels=128, folded_cells=32):
    tv = thought_vectors.astype(jnp.float32)
    if tv.ndim == 4:                       # torch: unsqueeze(1) -> T == 1
        tv_hw = tv                         # (B, H, W, C)
    else:
        # TODO(synk): only T == 1 of the 5-D branch is supported (the kt=0/2
        # weight-plane drop in preprocess_params assumes one temporal frame).
        assert tv.shape[1] == 1
        tv_hw = tv[:, 0]
    B, Hin, Win, Cin = tv_hw.shape
    assert _KH * _KW * Cin <= 128
    Ho = Hin                               # k=5, stride 1, pad 2
    Wo = (Win + 2 * 2 - _KW) // 2 + 1      # k=5, stride 2, pad 2
    # TODO(synk): odd Ho/Wo (MaxPool floor-drop of the trailing row/col) unsupported.
    assert Ho % 2 == 0 and Wo % 2 == 0
    Hp, Wp = Ho // 2, Wo // 2
    cells = Hp * Wp                        # To == 1
    assert cells == folded_cells, "1/cells folded in preprocess_params mismatch"

    # im2col for the kt=1 plane only (K = 25*Cin, zero-padded to 128).  Rows
    # are ordered (pool_pos, b, hp, wp) so the kernel max-pools with a cheap
    # leading-axis reduce; bf16 cast happens before the 25x expansion.
    # TODO(synk): for large inputs move patch extraction into the kernel
    # (manual DMA + scratch) to avoid the HBM expansion; here it is ~70 KB.
    x_pad = jnp.pad(tv_hw.astype(jnp.bfloat16), ((0, 0), (2, 2), (2, 2), (0, 0)))
    slabs = [x_pad[:, kh:kh + Ho, kw:kw + 2 * Wo:2, :]
             for kh in range(_KH) for kw in range(_KW)]
    K = _KH * _KW * Cin
    p = jnp.stack(slabs, axis=-2).reshape(B, Ho, Wo, K)
    p = p.reshape(B, Hp, 2, Wp, 2, K)
    p = jnp.transpose(p, (2, 4, 0, 1, 3, 5))           # (ph, pw, B, Hp, Wp, K)
    patches = jnp.pad(p.reshape(4 * B * cells, K), ((0, 0), (0, 128 - K)))

    S, I = stock_features.shape[1], stock_features.shape[2]
    assert I <= 128
    x_seq = jnp.transpose(stock_features.astype(jnp.bfloat16), (1, 0, 2))
    x_seq = jnp.pad(x_seq.reshape(S * B, I), ((0, 0), (0, 128 - I)))  # rows=(s,b)

    # Single packed activation buffer: one DMA for patches + LSTM inputs.
    act = jnp.concatenate([patches, x_seq], axis=0)    # (4*B*cells + S*B, 128)

    kernel = functools.partial(_stacn_fused_kernel, batch=B, cells=cells,
                               hidden=hidden_size, seq_len=S,
                               cnn_out=cnn_out_channels)
    # TODO(synk): on v7x this single ungridded call uses one of the two
    # TensorCores; add a batch grid / core_map split once B grows.
    out = pl.pallas_call(
        kernel,
        out_shape=jax.ShapeDtypeStruct((B, 1), jnp.float32),
        in_specs=[_VMEM, _VMEM, _VMEM],
        out_specs=_VMEM,
    )(act, prepped["w_pack"], prepped["s_pack"])
    return out


if __name__ == "__main__":
    key = jax.random.PRNGKey(0)
    k_param, k_tv, k_sf = jax.random.split(key, 3)

    B, Hsp, Wsp, Cin = 2, 16, 16, 4      # thought vectors (4-D branch)
    S = 8                                # stock-feature sequence length
    hidden_size = 32
    cnn_out_channels = 128

    params = init_params(k_param, input_size=Cin, hidden_size=hidden_size,
                         cnn_out_channels=cnn_out_channels)
    prepped = preprocess_params(params, input_size=Cin, hidden_size=hidden_size,
                                cnn_out_channels=cnn_out_channels,
                                input_hw=(Hsp, Wsp))

    thought_vectors = jax.random.normal(k_tv, (B, Hsp, Wsp, Cin), jnp.float32)
    stock_features = jax.random.normal(k_sf, (B, S, Cin), jnp.float32)

    Ho, Wo = Hsp, (Wsp + 4 - _KW) // 2 + 1
    folded_cells = (Ho // 2) * (Wo // 2)

    fwd = jax.jit(functools.partial(stacn_forward,
                                    hidden_size=hidden_size,
                                    cnn_out_channels=cnn_out_channels,
                                    folded_cells=folded_cells))
    out = fwd(prepped, thought_vectors, stock_features)
    out = jax.block_until_ready(out)

    assert out.shape == (B, 1), out.shape
    assert bool(jnp.all(jnp.isfinite(out)))
    print("KERNEL_OK")
</pallas_src>

<mosaic_0001>
module attributes {stable_mosaic.version = 11 : i64} {
  func.func @_stacn_fused_kernel(%arg0: memref<272x128xbf16, #tpu.memory_space<vmem>>, %arg1: memref<640x128xbf16, #tpu.memory_space<vmem>>, %arg2: memref<8x128xf32, #tpu.memory_space<vmem>>, %arg3: memref<2x1xf32, #tpu.memory_space<vmem>>) attributes {dimension_semantics = [], scalar_prefetch = 0 : i64, scratch_operands = 0 : i64, tpu.core_type = #tpu.core_type<tc>} {
    %c0 = arith.constant 0 : index
    %c0_0 = arith.constant 0 : index
    %0 = vector.load %arg2[%c0, %c0_0] : memref<8x128xf32, #tpu.memory_space<vmem>>, vector<1x128xf32>
    %c1 = arith.constant 1 : index
    %c0_1 = arith.constant 0 : index
    %1 = vector.load %arg2[%c1, %c0_1] : memref<8x128xf32, #tpu.memory_space<vmem>>, vector<1x128xf32>
    %c2 = arith.constant 2 : index
    %c0_2 = arith.constant 0 : index
    %2 = vector.load %arg2[%c2, %c0_2] : memref<8x128xf32, #tpu.memory_space<vmem>>, vector<1x128xf32>
    %c3 = arith.constant 3 : index
    %c0_3 = arith.constant 0 : index
    %3 = vector.load %arg2[%c3, %c0_3] : memref<8x128xf32, #tpu.memory_space<vmem>>, vector<1x128xf32>
    %c4 = arith.constant 4 : index
    %c0_4 = arith.constant 0 : index
    %4 = vector.load %arg2[%c4, %c0_4] : memref<8x128xf32, #tpu.memory_space<vmem>>, vector<1x128xf32>
    %c5 = arith.constant 5 : index
    %c0_5 = arith.constant 0 : index
    %5 = vector.load %arg2[%c5, %c0_5] : memref<8x128xf32, #tpu.memory_space<vmem>>, vector<1x128xf32>
    %c6 = arith.constant 6 : index
    %c0_6 = arith.constant 0 : index
    %6 = vector.load %arg2[%c6, %c0_6] : memref<8x128xf32, #tpu.memory_space<vmem>>, vector<1x128xf32>
    %c7 = arith.constant 7 : index
    %c0_7 = arith.constant 0 : index
    %7 = vector.load %arg2[%c7, %c0_7] : memref<8x128xf32, #tpu.memory_space<vmem>>, vector<1x1xf32>
    %c0_8 = arith.constant 0 : index
    %c0_9 = arith.constant 0 : index
    %8 = vector.load %arg0[%c0_8, %c0_9] : memref<272x128xbf16, #tpu.memory_space<vmem>>, vector<256x128xbf16>
    %c0_10 = arith.constant 0 : index
    %c0_11 = arith.constant 0 : index
    %9 = vector.load %arg1[%c0_10, %c0_11] : memref<640x128xbf16, #tpu.memory_space<vmem>>, vector<128x128xbf16>
    %cst = arith.constant dense<0.000000e+00> : vector<256x128xf32>
    %10 = tpu.matmul %8, %9, %cst {dimension_numbers = #tpu.dot_dimension_numbers<[1], [0], [0], [1], [0, 0, 1, 1], [], []>} : vector<256x128xbf16>, vector<128x128xbf16>, vector<256x128xf32> -> vector<256x128xf32>
    %11 = vector.broadcast %0 : vector<1x128xf32> to vector<256x128xf32>
    %12 = arith.mulf %10, %11 : vector<256x128xf32>
    %13 = vector.broadcast %1 : vector<1x128xf32> to vector<256x128xf32>
    %14 = arith.addf %12, %13 : vector<256x128xf32>
    %cst_12 = arith.constant 0.000000e+00 : f32
    %15 = vector.broadcast %cst_12 : f32 to vector<256x128xf32>
    %16 = arith.maximumf %14, %15 : vector<256x128xf32>
    %17 = vector.shape_cast %16 : vector<256x128xf32> to vector<4x64x128xf32>
    %cst_13 = arith.constant dense<0xFF800000> : vector<64x128xf32>
    %18 = vector.multi_reduction <maximumf>, %17, %cst_13 [0] : vector<4x64x128xf32> to vector<64x128xf32>
    %19 = vector.shape_cast %18 : vector<64x128xf32> to vector<2x32x128xf32>
    %cst_14 = arith.constant dense<0.000000e+00> : vector<2x128xf32>
    %20 = vector.multi_reduction <add>, %19, %cst_14 [1] : vector<2x32x128xf32> to vector<2x128xf32>
    %c256 = arith.constant 256 : index
    %c0_15 = arith.constant 0 : index
    %21 = vector.load %arg0[%c256, %c0_15] : memref<272x128xbf16, #tpu.memory_space<vmem>>, vector<16x128xbf16>
    %c128 = arith.constant 128 : index
    %c0_16 = arith.constant 0 : index
    %22 = vector.load %arg1[%c128, %c0_16] : memref<640x128xbf16, #tpu.memory_space<vmem>>, vector<128x128xbf16>
    %cst_17 = arith.constant dense<0.000000e+00> : vector<16x128xf32>
    %23 = tpu.matmul %21, %22, %cst_17 {dimension_numbers = #tpu.dot_dimension_numbers<[1], [0], [0], [1], [0, 0, 1, 1], [], []>} : vector<16x128xbf16>, vector<128x128xbf16>, vector<16x128xf32> -> vector<16x128xf32>
    %24 = vector.broadcast %2 : vector<1x128xf32> to vector<16x128xf32>
    %25 = arith.addf %23, %24 : vector<16x128xf32>
    %26 = vector.shape_cast %25 : vector<16x128xf32> to vector<8x2x128xf32>
    %c256_18 = arith.constant 256 : index
    %c0_19 = arith.constant 0 : index
    %27 = vector.load %arg1[%c256_18, %c0_19] : memref<640x128xbf16, #tpu.memory_space<vmem>>, vector<32x128xbf16>
    %c288 = arith.constant 288 : index
    %c0_20 = arith.constant 0 : index
    %28 = vector.load %arg1[%c288, %c0_20] : memref<640x128xbf16, #tpu.memory_space<vmem>>, vector<64x128xbf16>
    %cst_21 = arith.constant 0.000000e+00 : f32
    %29 = vector.broadcast %cst_21 : f32 to vector<2x32xf32>
    %cst_22 = arith.constant 0.000000e+00 : f32
    %30 = vector.broadcast %cst_22 : f32 to vector<2x32xf32>
    %cst_23 = arith.constant 0.000000e+00 : f32
    %31 = vector.broadcast %cst_23 : f32 to vector<2x32xf32>
    %cst_24 = arith.constant 0.000000e+00 : f32
    %32 = vector.broadcast %cst_24 : f32 to vector<2x32xf32>
    %33 = vector.extract_strided_slice %26 {offsets = [0, 0, 0], sizes = [1, 2, 128], strides = [1, 1, 1]} : vector<8x2x128xf32> to vector<1x2x128xf32>
    %34 = vector.shape_cast %33 : vector<1x2x128xf32> to vector<2x128xf32>
    %35 = arith.truncf %29 : vector<2x32xf32> to vector<2x32xbf16>
    %cst_25 = arith.constant dense<0.000000e+00> : vector<2x128xf32>
    %36 = tpu.matmul %35, %27, %cst_25 {dimension_numbers = #tpu.dot_dimension_numbers<[1], [0], [0], [1], [0, 0, 1, 1], [], []>} : vector<2x32xbf16>, vector<32x128xbf16>, vector<2x128xf32> -> vector<2x128xf32>
    %37 = arith.addf %34, %36 : vector<2x128xf32>
    %38 = arith.negf %37 : vector<2x128xf32>
    %39 = math.exp %38 : vector<2x128xf32>
    %cst_26 = arith.constant 1.000000e+00 : f32
    %40 = vector.broadcast %cst_26 : f32 to vector<2x128xf32>
    %41 = arith.addf %40, %39 : vector<2x128xf32>
    %42 = arith.divf %40, %41 : vector<2x128xf32>
    %43 = math.tanh %37 : vector<2x128xf32>
    %44 = vector.extract_strided_slice %42 {offsets = [0, 0], sizes = [2, 32], strides = [1, 1]} : vector<2x128xf32> to vector<2x32xf32>
    %45 = vector.extract_strided_slice %42 {offsets = [0, 32], sizes = [2, 32], strides = [1, 1]} : vector<2x128xf32> to vector<2x32xf32>
    %46 = vector.extract_strided_slice %43 {offsets = [0, 64], sizes = [2, 32], strides = [1, 1]} : vector<2x128xf32> to vector<2x32xf32>
    %47 = vector.extract_strided_slice %42 {offsets = [0, 96], sizes = [2, 32], strides = [1, 1]} : vector<2x128xf32> to vector<2x32xf32>
    %48 = arith.mulf %45, %30 : vector<2x32xf32>
    %49 = arith.mulf %44, %46 : vector<2x32xf32>
    %50 = arith.addf %48, %49 : vector<2x32xf32>
    %51 = math.tanh %50 : vector<2x32xf32>
    %52 = arith.mulf %47, %51 : vector<2x32xf32>
    %53 = tpu.concatenate %52, %31 in 1 : vector<2x32xf32>, vector<2x32xf32> -> vector<2x64xf32>
    %54 = arith.truncf %53 : vector<2x64xf32> to vector<2x64xbf16>
    %cst_27 = arith.constant dense<0.000000e+00> : vector<2x128xf32>
    %55 = tpu.matmul %54, %28, %cst_27 {dimension_numbers = #tpu.dot_dimension_numbers<[1], [0], [0], [1], [0, 0, 1, 1], [], []>} : vector<2x64xbf16>, vector<64x128xbf16>, vector<2x128xf32> -> vector<2x128xf32>
    %56 = vector.broadcast %3 : vector<1x128xf32> to vector<2x128xf32>
    %57 = arith.addf %55, %56 : vector<2x128xf32>
    %58 = arith.negf %57 : vector<2x128xf32>
    %59 = math.exp %58 : vector<2x128xf32>
    %cst_28 = arith.constant 1.000000e+00 : f32
    %60 = vector.broadcast %cst_28 : f32 to vector<2x128xf32>
    %61 = arith.addf %60, %59 : vector<2x128xf32>
    %62 = arith.divf %60, %61 : vector<2x128xf32>
    %63 = math.tanh %57 : vector<2x128xf32>
    %64 = vector.extract_strided_slice %62 {offsets = [0, 0], sizes = [2, 32], strides = [1, 1]} : vector<2x128xf32> to vector<2x32xf32>
    %65 = vector.extract_strided_slice %62 {offsets = [0, 32], sizes = [2, 32], strides = [1, 1]} : vector<2x128xf32> to vector<2x32xf32>
    %66 = vector.extract_strided_slice %63 {offsets = [0, 64], sizes = [2, 32], strides = [1, 1]} : vector<2x128xf32> to vector<2x32xf32>
    %67 = vector.extract_strided_slice %62 {offsets = [0, 96], sizes = [2, 32], strides = [1, 1]} : vector<2x128xf32> to vector<2x32xf32>
    %68 = arith.mulf %65, %32 : vector<2x32xf32>
    %69 = arith.mulf %64, %66 : vector<2x32xf32>
    %70 = arith.addf %68, %69 : vector<2x32xf32>
    %71 = math.tanh %70 : vector<2x32xf32>
    %72 = arith.mulf %67, %71 : vector<2x32xf32>
    %73 = vector.extract_strided_slice %26 {offsets = [1, 0, 0], sizes = [1, 2, 128], strides = [1, 1, 1]} : vector<8x2x128xf32> to vector<1x2x128xf32>
    %74 = vector.shape_cast %73 : vector<1x2x128xf32> to vector<2x128xf32>
    %75 = arith.truncf %52 : vector<2x32xf32> to vector<2x32xbf16>
    %cst_29 = arith.constant dense<0.000000e+00> : vector<2x128xf32>
    %76 = tpu.matmul %75, %27, %cst_29 {dimension_numbers = #tpu.dot_dimension_numbers<[1], [0], [0], [1], [0, 0, 1, 1], [], []>} : vector<2x32xbf16>, vector<32x128xbf16>, vector<2x128xf32> -> vector<2x128xf32>
    %77 = arith.addf %74, %76 : vector<2x128xf32>
    %78 = arith.negf %77 : vector<2x128xf32>
    %79 = math.exp %78 : vector<2x128xf32>
    %cst_30 = arith.constant 1.000000e+00 : f32
    %80 = vector.broadcast %cst_30 : f32 to vector<2x128xf32>
    %81 = arith.addf %80, %79 : vector<2x128xf32>
    %82 = arith.divf %80, %81 : vector<2x128xf32>
    %83 = math.tanh %77 : vector<2x128xf32>
    %84 = vector.extract_strided_slice %82 {offsets = [0, 0], sizes = [2, 32], strides = [1, 1]} : vector<2x128xf32> to vector<2x32xf32>
    %85 = vector.extract_strided_slice %82 {offsets = [0, 32], sizes = [2, 32], strides = [1, 1]} : vector<2x128xf32> to vector<2x32xf32>
    %86 = vector.extract_strided_slice %83 {offsets = [0, 64], sizes = [2, 32], strides = [1, 1]} : vector<2x128xf32> to vector<2x32xf32>
    %87 = vector.extract_strided_slice %82 {offsets = [0, 96], sizes = [2, 32], strides = [1, 1]} : vector<2x128xf32> to vector<2x32xf32>
    %88 = arith.mulf %85, %50 : vector<2x32xf32>
    %89 = arith.mulf %84, %86 : vector<2x32xf32>
    %90 = arith.addf %88, %89 : vector<2x32xf32>
    %91 = math.tanh %90 : vector<2x32xf32>
    %92 = arith.mulf %87, %91 : vector<2x32xf32>
    %93 = tpu.concatenate %92, %72 in 1 : vector<2x32xf32>, vector<2x32xf32> -> vector<2x64xf32>
    %94 = arith.truncf %93 : vector<2x64xf32> to vector<2x64xbf16>
    %cst_31 = arith.constant dense<0.000000e+00> : vector<2x128xf32>
    %95 = tpu.matmul %94, %28, %cst_31 {dimension_numbers = #tpu.dot_dimension_numbers<[1], [0], [0], [1], [0, 0, 1, 1], [], []>} : vector<2x64xbf16>, vector<64x128xbf16>, vector<2x128xf32> -> vector<2x128xf32>
    %96 = vector.broadcast %3 : vector<1x128xf32> to vector<2x128xf32>
    %97 = arith.addf %95, %96 : vector<2x128xf32>
    %98 = arith.negf %97 : vector<2x128xf32>
    %99 = math.exp %98 : vector<2x128xf32>
    %cst_32 = arith.constant 1.000000e+00 : f32
    %100 = vector.broadcast %cst_32 : f32 to vector<2x128xf32>
    %101 = arith.addf %100, %99 : vector<2x128xf32>
    %102 = arith.divf %100, %101 : vector<2x128xf32>
    %103 = math.tanh %97 : vector<2x128xf32>
    %104 = vector.extract_strided_slice %102 {offsets = [0, 0], sizes = [2, 32], strides = [1, 1]} : vector<2x128xf32> to vector<2x32xf32>
    %105 = vector.extract_strided_slice %102 {offsets = [0, 32], sizes = [2, 32], strides = [1, 1]} : vector<2x128xf32> to vector<2x32xf32>
    %106 = vector.extract_strided_slice %103 {offsets = [0, 64], sizes = [2, 32], strides = [1, 1]} : vector<2x128xf32> to vector<2x32xf32>
    %107 = vector.extract_strided_slice %102 {offsets = [0, 96], sizes = [2, 32], strides = [1, 1]} : vector<2x128xf32> to vector<2x32xf32>
    %108 = arith.mulf %105, %70 : vector<2x32xf32>
    %109 = arith.mulf %104, %106 : vector<2x32xf32>
    %110 = arith.addf %108, %109 : vector<2x32xf32>
    %111 = math.tanh %110 : vector<2x32xf32>
    %112 = arith.mulf %107, %111 : vector<2x32xf32>
    %113 = vector.extract_strided_slice %26 {offsets = [2, 0, 0], sizes = [1, 2, 128], strides = [1, 1, 1]} : vector<8x2x128xf32> to vector<1x2x128xf32>
    %114 = vector.shape_cast %113 : vector<1x2x128xf32> to vector<2x128xf32>
    %115 = arith.truncf %92 : vector<2x32xf32> to vector<2x32xbf16>
    %cst_33 = arith.constant dense<0.000000e+00> : vector<2x128xf32>
    %116 = tpu.matmul %115, %27, %cst_33 {dimension_numbers = #tpu.dot_dimension_numbers<[1], [0], [0], [1], [0, 0, 1, 1], [], []>} : vector<2x32xbf16>, vector<32x128xbf16>, vector<2x128xf32> -> vector<2x128xf32>
    %117 = arith.addf %114, %116 : vector<2x128xf32>
    %118 = arith.negf %117 : vector<2x128xf32>
    %119 = math.exp %118 : vector<2x128xf32>
    %cst_34 = arith.constant 1.000000e+00 : f32
    %120 = vector.broadcast %cst_34 : f32 to vector<2x128xf32>
    %121 = arith.addf %120, %119 : vector<2x128xf32>
    %122 = arith.divf %120, %121 : vector<2x128xf32>
    %123 = math.tanh %117 : vector<2x128xf32>
    %124 = vector.extract_strided_slice %122 {offsets = [0, 0], sizes = [2, 32], strides = [1, 1]} : vector<2x128xf32> to vector<2x32xf32>
    %125 = vector.extract_strided_slice %122 {offsets = [0, 32], sizes = [2, 32], strides = [1, 1]} : vector<2x128xf32> to vector<2x32xf32>
    %126 = vector.extract_strided_slice %123 {offsets = [0, 64], sizes = [2, 32], strides = [1, 1]} : vector<2x128xf32> to vector<2x32xf32>
    %127 = vector.extract_strided_slice %122 {offsets = [0, 96], sizes = [2, 32], strides = [1, 1]} : vector<2x128xf32> to vector<2x32xf32>
    %128 = arith.mulf %125, %90 : vector<2x32xf32>
    %129 = arith.mulf %124, %126 : vector<2x32xf32>
    %130 = arith.addf %128, %129 : vector<2x32xf32>
    %131 = math.tanh %130 : vector<2x32xf32>
    %132 = arith.mulf %127, %131 : vector<2x32xf32>
    %133 = tpu.concatenate %132, %112 in 1 : vector<2x32xf32>, vector<2x32xf32> -> vector<2x64xf32>
    %134 = arith.truncf %133 : vector<2x64xf32> to vector<2x64xbf16>
    %cst_35 = arith.constant dense<0.000000e+00> : vector<2x128xf32>
    %135 = tpu.matmul %134, %28, %cst_35 {dimension_numbers = #tpu.dot_dimension_numbers<[1], [0], [0], [1], [0, 0, 1, 1], [], []>} : vector<2x64xbf16>, vector<64x128xbf16>, vector<2x128xf32> -> vector<2x128xf32>
    %136 = vector.broadcast %3 : vector<1x128xf32> to vector<2x128xf32>
    %137 = arith.addf %135, %136 : vector<2x128xf32>
    %138 = arith.negf %137 : vector<2x128xf32>
    %139 = math.exp %138 : vector<2x128xf32>
    %cst_36 = arith.constant 1.000000e+00 : f32
    %140 = vector.broadcast %cst_36 : f32 to vector<2x128xf32>
    %141 = arith.addf %140, %139 : vector<2x128xf32>
    %142 = arith.divf %140, %141 : vector<2x128xf32>
    %143 = math.tanh %137 : vector<2x128xf32>
    %144 = vector.extract_strided_slice %142 {offsets = [0, 0], sizes = [2, 32], strides = [1, 1]} : vector<2x128xf32> to vector<2x32xf32>
    %145 = vector.extract_strided_slice %142 {offsets = [0, 32], sizes = [2, 32], strides = [1, 1]} : vector<2x128xf32> to vector<2x32xf32>
    %146 = vector.extract_strided_slice %143 {offsets = [0, 64], sizes = [2, 32], strides = [1, 1]} : vector<2x128xf32> to vector<2x32xf32>
    %147 = vector.extract_strided_slice %142 {offsets = [0, 96], sizes = [2, 32], strides = [1, 1]} : vector<2x128xf32> to vector<2x32xf32>
    %148 = arith.mulf %145, %110 : vector<2x32xf32>
    %149 = arith.mulf %144, %146 : vector<2x32xf32>
    %150 = arith.addf %148, %149 : vector<2x32xf32>
    %151 = math.tanh %150 : vector<2x32xf32>
    %152 = arith.mulf %147, %151 : vector<2x32xf32>
    %153 = vector.extract_strided_slice %26 {offsets = [3, 0, 0], sizes = [1, 2, 128], strides = [1, 1, 1]} : vector<8x2x128xf32> to vector<1x2x128xf32>
    %154 = vector.shape_cast %153 : vector<1x2x128xf32> to vector<2x128xf32>
    %155 = arith.truncf %132 : vector<2x32xf32> to vector<2x32xbf16>
    %cst_37 = arith.constant dense<0.000000e+00> : vector<2x128xf32>
    %156 = tpu.matmul %155, %27, %cst_37 {dimension_numbers = #tpu.dot_dimension_numbers<[1], [0], [0], [1], [0, 0, 1, 1], [], []>} : vector<2x32xbf16>, vector<32x128xbf16>, vector<2x128xf32> -> vector<2x128xf32>
    %157 = arith.addf %154, %156 : vector<2x128xf32>
    %158 = arith.negf %157 : vector<2x128xf32>
    %159 = math.exp %158 : vector<2x128xf32>
    %cst_38 = arith.constant 1.000000e+00 : f32
    %160 = vector.broadcast %cst_38 : f32 to vector<2x128xf32>
    %161 = arith.addf %160, %159 : vector<2x128xf32>
    %162 = arith.divf %160, %161 : vector<2x128xf32>
    %163 = math.tanh %157 : vector<2x128xf32>
    %164 = vector.extract_strided_slice %162 {offsets = [0, 0], sizes = [2, 32], strides = [1, 1]} : vector<2x128xf32> to vector<2x32xf32>
    %165 = vector.extract_strided_slice %162 {offsets = [0, 32], sizes = [2, 32], strides = [1, 1]} : vector<2x128xf32> to vector<2x32xf32>
    %166 = vector.extract_strided_slice %163 {offsets = [0, 64], sizes = [2, 32], strides = [1, 1]} : vector<2x128xf32> to vector<2x32xf32>
    %167 = vector.extract_strided_slice %162 {offsets = [0, 96], sizes = [2, 32], strides = [1, 1]} : vector<2x128xf32> to vector<2x32xf32>
    %168 = arith.mulf %165, %130 : vector<2x32xf32>
    %169 = arith.mulf %164, %166 : vector<2x32xf32>
    %170 = arith.addf %168, %169 : vector<2x32xf32>
    %171 = math.tanh %170 : vector<2x32xf32>
    %172 = arith.mulf %167, %171 : vector<2x32xf32>
    %173 = tpu.concatenate %172, %152 in 1 : vector<2x32xf32>, vector<2x32xf32> -> vector<2x64xf32>
    %174 = arith.truncf %173 : vector<2x64xf32> to vector<2x64xbf16>
    %cst_39 = arith.constant dense<0.000000e+00> : vector<2x128xf32>
    %175 = tpu.matmul %174, %28, %cst_39 {dimension_numbers = #tpu.dot_dimension_numbers<[1], [0], [0], [1], [0, 0, 1, 1], [], []>} : vector<2x64xbf16>, vector<64x128xbf16>, vector<2x128xf32> -> vector<2x128xf32>
    %176 = vector.broadcast %3 : vector<1x128xf32> to vector<2x128xf32>
    %177 = arith.addf %175, %176 : vector<2x128xf32>
    %178 = arith.negf %177 : vector<2x128xf32>
    %179 = math.exp %178 : vector<2x128xf32>
    %cst_40 = arith.constant 1.000000e+00 : f32
    %180 = vector.broadcast %cst_40 : f32 to vector<2x128xf32>
    %181 = arith.addf %180, %179 : vector<2x128xf32>
    %182 = arith.divf %180, %181 : vector<2x128xf32>
    %183 = math.tanh %177 : vector<2x128xf32>
    %184 = vector.extract_strided_slice %182 {offsets = [0, 0], sizes = [2, 32], strides = [1, 1]} : vector<2x128xf32> to vector<2x32xf32>
    %185 = vector.extract_strided_slice %182 {offsets = [0, 32], sizes = [2, 32], strides = [1, 1]} : vector<2x128xf32> to vector<2x32xf32>
    %186 = vector.extract_strided_slice %183 {offsets = [0, 64], sizes = [2, 32], strides = [1, 1]} : vector<2x128xf32> to vector<2x32xf32>
    %187 = vector.extract_strided_slice %182 {offsets = [0, 96], sizes = [2, 32], strides = [1, 1]} : vector<2x128xf32> to vector<2x32xf32>
    %188 = arith.mulf %185, %150 : vector<2x32xf32>
    %189 = arith.mulf %184, %186 : vector<2x32xf32>
    %190 = arith.addf %188, %189 : vector<2x32xf32>
    %191 = math.tanh %190 : vector<2x32xf32>
    %192 = arith.mulf %187, %191 : vector<2x32xf32>
    %193 = vector.extract_strided_slice %26 {offsets = [4, 0, 0], sizes = [1, 2, 128], strides = [1, 1, 1]} : vector<8x2x128xf32> to vector<1x2x128xf32>
    %194 = vector.shape_cast %193 : vector<1x2x128xf32> to vector<2x128xf32>
    %195 = arith.truncf %172 : vector<2x32xf32> to vector<2x32xbf16>
    %cst_41 = arith.constant dense<0.000000e+00> : vector<2x128xf32>
    %196 = tpu.matmul %195, %27, %cst_41 {dimension_numbers = #tpu.dot_dimension_numbers<[1], [0], [0], [1], [0, 0, 1, 1], [], []>} : vector<2x32xbf16>, vector<32x128xbf16>, vector<2x128xf32> -> vector<2x128xf32>
    %197 = arith.addf %194, %196 : vector<2x128xf32>
    %198 = arith.negf %197 : vector<2x128xf32>
    %199 = math.exp %198 : vector<2x128xf32>
    %cst_42 = arith.constant 1.000000e+00 : f32
    %200 = vector.broadcast %cst_42 : f32 to vector<2x128xf32>
    %201 = arith.addf %200, %199 : vector<2x128xf32>
    %202 = arith.divf %200, %201 : vector<2x128xf32>
    %203 = math.tanh %197 : vector<2x128xf32>
    %204 = vector.extract_strided_slice %202 {offsets = [0, 0], sizes = [2, 32], strides = [1, 1]} : vector<2x128xf32> to vector<2x32xf32>
    %205 = vector.extract_strided_slice %202 {offsets = [0, 32], sizes = [2, 32], strides = [1, 1]} : vector<2x128xf32> to vector<2x32xf32>
    %206 = vector.extract_strided_slice %203 {offsets = [0, 64], sizes = [2, 32], strides = [1, 1]} : vector<2x128xf32> to vector<2x32xf32>
    %207 = vector.extract_strided_slice %202 {offsets = [0, 96], sizes = [2, 32], strides = [1, 1]} : vector<2x128xf32> to vector<2x32xf32>
    %208 = arith.mulf %205, %170 : vector<2x32xf32>
    %209 = arith.mulf %204, %206 : vector<2x32xf32>
    %210 = arith.addf %208, %209 : vector<2x32xf32>
    %211 = math.tanh %210 : vector<2x32xf32>
    %212 = arith.mulf %207, %211 : vector<2x32xf32>
    %213 = tpu.concatenate %212, %192 in 1 : vector<2x32xf32>, vector<2x32xf32> -> vector<2x64xf32>
    %214 = arith.truncf %213 : vector<2x64xf32> to vector<2x64xbf16>
    %cst_43 = arith.constant dense<0.000000e+00> : vector<2x128xf32>
    %215 = tpu.matmul %214, %28, %cst_43 {dimension_numbers = #tpu.dot_dimension_numbers<[1], [0], [0], [1], [0, 0, 1, 1], [], []>} : vector<2x64xbf16>, vector<64x128xbf16>, vector<2x128xf32> -> vector<2x128xf32>
    %216 = vector.broadcast %3 : vector<1x128xf32> to vector<2x128xf32>
    %217 = arith.addf %215, %216 : vector<2x128xf32>
    %218 = arith.negf %217 : vector<2x128xf32>
    %219 = math.exp %218 : vector<2x128xf32>
    %cst_44 = arith.constant 1.000000e+00 : f32
    %220 = vector.broadcast %cst_44 : f32 to vector<2x128xf32>
    %221 = arith.addf %220, %219 : vector<2x128xf32>
    %222 = arith.divf %220, %221 : vector<2x128xf32>
    %223 = math.tanh %217 : vector<2x128xf32>
    %224 = vector.extract_strided_slice %222 {offsets = [0, 0], sizes = [2, 32], strides = [1, 1]} : vector<2x128xf32> to vector<2x32xf32>
    %225 = vector.extract_strided_slice %222 {offsets = [0, 32], sizes = [2, 32], strides = [1, 1]} : vector<2x128xf32> to vector<2x32xf32>
    %226 = vector.extract_strided_slice %223 {offsets = [0, 64], sizes = [2, 32], strides = [1, 1]} : vector<2x128xf32> to vector<2x32xf32>
    %227 = vector.extract_strided_slice %222 {offsets = [0, 96], sizes = [2, 32], strides = [1, 1]} : vector<2x128xf32> to vector<2x32xf32>
    %228 = arith.mulf %225, %190 : vector<2x32xf32>
    %229 = arith.mulf %224, %226 : vector<2x32xf32>
    %230 = arith.addf %228, %229 : vector<2x32xf32>
    %231 = math.tanh %230 : vector<2x32xf32>
    %232 = arith.mulf %227, %231 : vector<2x32xf32>
    %233 = vector.extract_strided_slice %26 {offsets = [5, 0, 0], sizes = [1, 2, 128], strides = [1, 1, 1]} : vector<8x2x128xf32> to vector<1x2x128xf32>
    %234 = vector.shape_cast %233 : vector<1x2x128xf32> to vector<2x128xf32>
    %235 = arith.truncf %212 : vector<2x32xf32> to vector<2x32xbf16>
    %cst_45 = arith.constant dense<0.000000e+00> : vector<2x128xf32>
    %236 = tpu.matmul %235, %27, %cst_45 {dimension_numbers = #tpu.dot_dimension_numbers<[1], [0], [0], [1], [0, 0, 1, 1], [], []>} : vector<2x32xbf16>, vector<32x128xbf16>, vector<2x128xf32> -> vector<2x128xf32>
    %237 = arith.addf %234, %236 : vector<2x128xf32>
    %238 = arith.negf %237 : vector<2x128xf32>
    %239 = math.exp %238 : vector<2x128xf32>
    %cst_46 = arith.constant 1.000000e+00 : f32
    %240 = vector.broadcast %cst_46 : f32 to vector<2x128xf32>
    %241 = arith.addf %240, %239 : vector<2x128xf32>
    %242 = arith.divf %240, %241 : vector<2x128xf32>
    %243 = math.tanh %237 : vector<2x128xf32>
    %244 = vector.extract_strided_slice %242 {offsets = [0, 0], sizes = [2, 32], strides = [1, 1]} : vector<2x128xf32> to vector<2x32xf32>
    %245 = vector.extract_strided_slice %242 {offsets = [0, 32], sizes = [2, 32], strides = [1, 1]} : vector<2x128xf32> to vector<2x32xf32>
    %246 = vector.extract_strided_slice %243 {offsets = [0, 64], sizes = [2, 32], strides = [1, 1]} : vector<2x128xf32> to vector<2x32xf32>
    %247 = vector.extract_strided_slice %242 {offsets = [0, 96], sizes = [2, 32], strides = [1, 1]} : vector<2x128xf32> to vector<2x32xf32>
    %248 = arith.mulf %245, %210 : vector<2x32xf32>
    %249 = arith.mulf %244, %246 : vector<2x32xf32>
    %250 = arith.addf %248, %249 : vector<2x32xf32>
    %251 = math.tanh %250 : vector<2x32xf32>
    %252 = arith.mulf %247, %251 : vector<2x32xf32>
    %253 = tpu.concatenate %252, %232 in 1 : vector<2x32xf32>, vector<2x32xf32> -> vector<2x64xf32>
    %254 = arith.truncf %253 : vector<2x64xf32> to vector<2x64xbf16>
    %cst_47 = arith.constant dense<0.000000e+00> : vector<2x128xf32>
    %255 = tpu.matmul %254, %28, %cst_47 {dimension_numbers = #tpu.dot_dimension_numbers<[1], [0], [0], [1], [0, 0, 1, 1], [], []>} : vector<2x64xbf16>, vector<64x128xbf16>, vector<2x128xf32> -> vector<2x128xf32>
    %256 = vector.broadcast %3 : vector<1x128xf32> to vector<2x128xf32>
    %257 = arith.addf %255, %256 : vector<2x128xf32>
    %258 = arith.negf %257 : vector<2x128xf32>
    %259 = math.exp %258 : vector<2x128xf32>
    %cst_48 = arith.constant 1.000000e+00 : f32
    %260 = vector.broadcast %cst_48 : f32 to vector<2x128xf32>
    %261 = arith.addf %260, %259 : vector<2x128xf32>
    %262 = arith.divf %260, %261 : vector<2x128xf32>
    %263 = math.tanh %257 : vector<2x128xf32>
    %264 = vector.extract_strided_slice %262 {offsets = [0, 0], sizes = [2, 32], strides = [1, 1]} : vector<2x128xf32> to vector<2x32xf32>
    %265 = vector.extract_strided_slice %262 {offsets = [0, 32], sizes = [2, 32], strides = [1, 1]} : vector<2x128xf32> to vector<2x32xf32>
    %266 = vector.extract_strided_slice %263 {offsets = [0, 64], sizes = [2, 32], strides = [1, 1]} : vector<2x128xf32> to vector<2x32xf32>
    %267 = vector.extract_strided_slice %262 {offsets = [0, 96], sizes = [2, 32], strides = [1, 1]} : vector<2x128xf32> to vector<2x32xf32>
    %268 = arith.mulf %265, %230 : vector<2x32xf32>
    %269 = arith.mulf %264, %266 : vector<2x32xf32>
    %270 = arith.addf %268, %269 : vector<2x32xf32>
    %271 = math.tanh %270 : vector<2x32xf32>
    %272 = arith.mulf %267, %271 : vector<2x32xf32>
    %273 = vector.extract_strided_slice %26 {offsets = [6, 0, 0], sizes = [1, 2, 128], strides = [1, 1, 1]} : vector<8x2x128xf32> to vector<1x2x128xf32>
    %274 = vector.shape_cast %273 : vector<1x2x128xf32> to vector<2x128xf32>
    %275 = arith.truncf %252 : vector<2x32xf32> to vector<2x32xbf16>
    %cst_49 = arith.constant dense<0.000000e+00> : vector<2x128xf32>
    %276 = tpu.matmul %275, %27, %cst_49 {dimension_numbers = #tpu.dot_dimension_numbers<[1], [0], [0], [1], [0, 0, 1, 1], [], []>} : vector<2x32xbf16>, vector<32x128xbf16>, vector<2x128xf32> -> vector<2x128xf32>
    %277 = arith.addf %274, %276 : vector<2x128xf32>
    %278 = arith.negf %277 : vector<2x128xf32>
    %279 = math.exp %278 : vector<2x128xf32>
    %cst_50 = arith.constant 1.000000e+00 : f32
    %280 = vector.broadcast %cst_50 : f32 to vector<2x128xf32>
    %281 = arith.addf %280, %279 : vector<2x128xf32>
    %282 = arith.divf %280, %281 : vector<2x128xf32>
    %283 = math.tanh %277 : vector<2x128xf32>
    %284 = vector.extract_strided_slice %282 {offsets = [0, 0], sizes = [2, 32], strides = [1, 1]} : vector<2x128xf32> to vector<2x32xf32>
    %285 = vector.extract_strided_slice %282 {offsets = [0, 32], sizes = [2, 32], strides = [1, 1]} : vector<2x128xf32> to vector<2x32xf32>
    %286 = vector.extract_strided_slice %283 {offsets = [0, 64], sizes = [2, 32], strides = [1, 1]} : vector<2x128xf32> to vector<2x32xf32>
    %287 = vector.extract_strided_slice %282 {offsets = [0, 96], sizes = [2, 32], strides = [1, 1]} : vector<2x128xf32> to vector<2x32xf32>
    %288 = arith.mulf %285, %250 : vector<2x32xf32>
    %289 = arith.mulf %284, %286 : vector<2x32xf32>
    %290 = arith.addf %288, %289 : vector<2x32xf32>
    %291 = math.tanh %290 : vector<2x32xf32>
    %292 = arith.mulf %287, %291 : vector<2x32xf32>
    %293 = tpu.concatenate %292, %272 in 1 : vector<2x32xf32>, vector<2x32xf32> -> vector<2x64xf32>
    %294 = arith.truncf %293 : vector<2x64xf32> to vector<2x64xbf16>
    %cst_51 = arith.constant dense<0.000000e+00> : vector<2x128xf32>
    %295 = tpu.matmul %294, %28, %cst_51 {dimension_numbers = #tpu.dot_dimension_numbers<[1], [0], [0], [1], [0, 0, 1, 1], [], []>} : vector<2x64xbf16>, vector<64x128xbf16>, vector<2x128xf32> -> vector<2x128xf32>
    %296 = vector.broadcast %3 : vector<1x128xf32> to vector<2x128xf32>
    %297 = arith.addf %295, %296 : vector<2x128xf32>
    %298 = arith.negf %297 : vector<2x128xf32>
    %299 = math.exp %298 : vector<2x128xf32>
    %cst_52 = arith.constant 1.000000e+00 : f32
    %300 = vector.broadcast %cst_52 : f32 to vector<2x128xf32>
    %301 = arith.addf %300, %299 : vector<2x128xf32>
    %302 = arith.divf %300, %301 : vector<2x128xf32>
    %303 = math.tanh %297 : vector<2x128xf32>
    %304 = vector.extract_strided_slice %302 {offsets = [0, 0], sizes = [2, 32], strides = [1, 1]} : vector<2x128xf32> to vector<2x32xf32>
    %305 = vector.extract_strided_slice %302 {offsets = [0, 32], sizes = [2, 32], strides = [1, 1]} : vector<2x128xf32> to vector<2x32xf32>
    %306 = vector.extract_strided_slice %303 {offsets = [0, 64], sizes = [2, 32], strides = [1, 1]} : vector<2x128xf32> to vector<2x32xf32>
    %307 = vector.extract_strided_slice %302 {offsets = [0, 96], sizes = [2, 32], strides = [1, 1]} : vector<2x128xf32> to vector<2x32xf32>
    %308 = arith.mulf %305, %270 : vector<2x32xf32>
    %309 = arith.mulf %304, %306 : vector<2x32xf32>
    %310 = arith.addf %308, %309 : vector<2x32xf32>
    %311 = math.tanh %310 : vector<2x32xf32>
    %312 = arith.mulf %307, %311 : vector<2x32xf32>
    %313 = vector.extract_strided_slice %26 {offsets = [7, 0, 0], sizes = [1, 2, 128], strides = [1, 1, 1]} : vector<8x2x128xf32> to vector<1x2x128xf32>
    %314 = vector.shape_cast %313 : vector<1x2x128xf32> to vector<2x128xf32>
    %315 = arith.truncf %292 : vector<2x32xf32> to vector<2x32xbf16>
    %cst_53 = arith.constant dense<0.000000e+00> : vector<2x128xf32>
    %316 = tpu.matmul %315, %27, %cst_53 {dimension_numbers = #tpu.dot_dimension_numbers<[1], [0], [0], [1], [0, 0, 1, 1], [], []>} : vector<2x32xbf16>, vector<32x128xbf16>, vector<2x128xf32> -> vector<2x128xf32>
    %317 = arith.addf %314, %316 : vector<2x128xf32>
    %318 = arith.negf %317 : vector<2x128xf32>
    %319 = math.exp %318 : vector<2x128xf32>
    %cst_54 = arith.constant 1.000000e+00 : f32
    %320 = vector.broadcast %cst_54 : f32 to vector<2x128xf32>
    %321 = arith.addf %320, %319 : vector<2x128xf32>
    %322 = arith.divf %320, %321 : vector<2x128xf32>
    %323 = math.tanh %317 : vector<2x128xf32>
    %324 = vector.extract_strided_slice %322 {offsets = [0, 0], sizes = [2, 32], strides = [1, 1]} : vector<2x128xf32> to vector<2x32xf32>
    %325 = vector.extract_strided_slice %322 {offsets = [0, 32], sizes = [2, 32], strides = [1, 1]} : vector<2x128xf32> to vector<2x32xf32>
    %326 = vector.extract_strided_slice %323 {offsets = [0, 64], sizes = [2, 32], strides = [1, 1]} : vector<2x128xf32> to vector<2x32xf32>
    %327 = vector.extract_strided_slice %322 {offsets = [0, 96], sizes = [2, 32], strides = [1, 1]} : vector<2x128xf32> to vector<2x32xf32>
    %328 = arith.mulf %325, %290 : vector<2x32xf32>
    %329 = arith.mulf %324, %326 : vector<2x32xf32>
    %330 = arith.addf %328, %329 : vector<2x32xf32>
    %331 = math.tanh %330 : vector<2x32xf32>
    %332 = arith.mulf %327, %331 : vector<2x32xf32>
    %333 = tpu.concatenate %332, %312 in 1 : vector<2x32xf32>, vector<2x32xf32> -> vector<2x64xf32>
    %334 = arith.truncf %333 : vector<2x64xf32> to vector<2x64xbf16>
    %cst_55 = arith.constant dense<0.000000e+00> : vector<2x128xf32>
    %335 = tpu.matmul %334, %28, %cst_55 {dimension_numbers = #tpu.dot_dimension_numbers<[1], [0], [0], [1], [0, 0, 1, 1], [], []>} : vector<2x64xbf16>, vector<64x128xbf16>, vector<2x128xf32> -> vector<2x128xf32>
    %336 = vector.broadcast %3 : vector<1x128xf32> to vector<2x128xf32>
    %337 = arith.addf %335, %336 : vector<2x128xf32>
    %338 = arith.negf %337 : vector<2x128xf32>
    %339 = math.exp %338 : vector<2x128xf32>
    %cst_56 = arith.constant 1.000000e+00 : f32
    %340 = vector.broadcast %cst_56 : f32 to vector<2x128xf32>
    %341 = arith.addf %340, %339 : vector<2x128xf32>
    %342 = arith.divf %340, %341 : vector<2x128xf32>
    %343 = math.tanh %337 : vector<2x128xf32>
    %344 = vector.extract_strided_slice %342 {offsets = [0, 0], sizes = [2, 32], strides = [1, 1]} : vector<2x128xf32> to vector<2x32xf32>
    %345 = vector.extract_strided_slice %342 {offsets = [0, 32], sizes = [2, 32], strides = [1, 1]} : vector<2x128xf32> to vector<2x32xf32>
    %346 = vector.extract_strided_slice %343 {offsets = [0, 64], sizes = [2, 32], strides = [1, 1]} : vector<2x128xf32> to vector<2x32xf32>
    %347 = vector.extract_strided_slice %342 {offsets = [0, 96], sizes = [2, 32], strides = [1, 1]} : vector<2x128xf32> to vector<2x32xf32>
    %348 = arith.mulf %345, %310 : vector<2x32xf32>
    %349 = arith.mulf %344, %346 : vector<2x32xf32>
    %350 = arith.addf %348, %349 : vector<2x32xf32>
    %351 = math.tanh %350 : vector<2x32xf32>
    %352 = arith.mulf %347, %351 : vector<2x32xf32>
    %353 = arith.truncf %20 : vector<2x128xf32> to vector<2x128xbf16>
    %c352 = arith.constant 352 : index
    %c0_57 = arith.constant 0 : index
    %354 = vector.load %arg1[%c352, %c0_57] : memref<640x128xbf16, #tpu.memory_space<vmem>>, vector<128x128xbf16>
    %cst_58 = arith.constant dense<0.000000e+00> : vector<2x128xf32>
    %355 = tpu.matmul %353, %354, %cst_58 {dimension_numbers = #tpu.dot_dimension_numbers<[1], [0], [0], [1], [0, 0, 1, 1], [], []>} : vector<2x128xbf16>, vector<128x128xbf16>, vector<2x128xf32> -> vector<2x128xf32>
    %356 = arith.truncf %352 : vector<2x32xf32> to vector<2x32xbf16>
    %c480 = arith.constant 480 : index
    %c0_59 = arith.constant 0 : index
    %357 = vector.load %arg1[%c480, %c0_59] : memref<640x128xbf16, #tpu.memory_space<vmem>>, vector<32x128xbf16>
    %cst_60 = arith.constant dense<0.000000e+00> : vector<2x128xf32>
    %358 = tpu.matmul %356, %357, %cst_60 {dimension_numbers = #tpu.dot_dimension_numbers<[1], [0], [0], [1], [0, 0, 1, 1], [], []>} : vector<2x32xbf16>, vector<32x128xbf16>, vector<2x128xf32> -> vector<2x128xf32>
    %359 = arith.addf %355, %358 : vector<2x128xf32>
    %360 = vector.broadcast %4 : vector<1x128xf32> to vector<2x128xf32>
    %361 = arith.addf %359, %360 : vector<2x128xf32>
    %cst_61 = arith.constant 0.000000e+00 : f32
    %362 = vector.broadcast %cst_61 : f32 to vector<2x128xf32>
    %363 = arith.maximumf %361, %362 : vector<2x128xf32>
    %364 = arith.truncf %363 : vector<2x128xf32> to vector<2x128xbf16>
    %c512 = arith.constant 512 : index
    %c0_62 = arith.constant 0 : index
    %365 = vector.load %arg1[%c512, %c0_62] : memref<640x128xbf16, #tpu.memory_space<vmem>>, vector<128x128xbf16>
    %cst_63 = arith.constant dense<0.000000e+00> : vector<2x128xf32>
    %366 = tpu.matmul %364, %365, %cst_63 {dimension_numbers = #tpu.dot_dimension_numbers<[1], [0], [0], [1], [0, 0, 1, 1], [], []>} : vector<2x128xbf16>, vector<128x128xbf16>, vector<2x128xf32> -> vector<2x128xf32>
    %367 = vector.broadcast %5 : vector<1x128xf32> to vector<2x128xf32>
    %368 = arith.addf %366, %367 : vector<2x128xf32>
    %cst_64 = arith.constant 0.000000e+00 : f32
    %369 = vector.broadcast %cst_64 : f32 to vector<2x128xf32>
    %370 = arith.maximumf %368, %369 : vector<2x128xf32>
    %371 = vector.broadcast %6 : vector<1x128xf32> to vector<2x128xf32>
    %372 = arith.mulf %370, %371 : vector<2x128xf32>
    %cst_65 = arith.constant dense<0.000000e+00> : vector<2xf32>
    %373 = vector.multi_reduction <add>, %372, %cst_65 [1] : vector<2x128xf32> to vector<2xf32>
    %374 = vector.shape_cast %373 : vector<2xf32> to vector<2x1xf32>
    %375 = vector.broadcast %7 : vector<1x1xf32> to vector<2x1xf32>
    %376 = arith.addf %374, %375 : vector<2x1xf32>
    %c0_66 = arith.constant 0 : index
    %c0_67 = arith.constant 0 : index
    %377 = vector.load %arg3[%c0_66, %c0_67] : memref<2x1xf32, #tpu.memory_space<vmem>>, vector<2x1xf32>
    tpu.vector_store %arg3[%c0_66, %c0_67], %376 {strides = array<i32>} : memref<2x1xf32, #tpu.memory_space<vmem>>, vector<2x1xf32>,
    return
  }
}

</mosaic_0001>

<llo_original>
// kernel: stacn_forward.1
$region0: #{stacn_forward.1}
  #allocation0 [shape = 'u32[]', space=smem, size = 0x4, offset = 0x4, fixed_abs, tag = 'smem constant byte address 0x4 - core index']
  #allocation1 [shape = 'u32[72,128]{1,0:T(1,128)}', space=vmem, size = 0x9000, scoped, tag = 'internal scratch']
  %s0 = inlined_call_operand.vmem [shape: bf16[272,128], index: 0, kind: input, shape index: {}]
  %s1 = inlined_call_operand.vmem [shape: bf16[640,128], index: 1, kind: input, shape index: {}]
  %s2 = inlined_call_operand.vmem [shape: f32[8,128], index: 2, kind: input, shape index: {}]
  %s3 = inlined_call_operand.vmem [shape: f32[2,1], index: 3, kind: output, shape index: {}]
  %s4 = sld [smem:[#allocation0]]
  $region22: #{stacn_forward.1} parent=0
    _
  %s6 = ssub.s32 1, %s4
  %s7 = scalar_select 0, %s6, %s4
  // Predicated region
  $region2: #{stacn_forward.1} parent=0 // pred_check
    _
  $region3: #{stacn_forward.1} parent=0 // pred_check_branch
    %9 = sbr.rel (0) target = $region5
  $region4: #{stacn_forward.1} parent=0 // pred_region
    _
  $region5: #{stacn_forward.1} parent=0 // pred_fallthru
    _
  // Predicated region
  $region6: #{stacn_forward.1} parent=0 // pred_check
    _
  $region7: #{stacn_forward.1} parent=0 // pred_check_branch
    %11 = sbr.rel (0) target = $region9
  $region8: #{stacn_forward.1} parent=0 // pred_region
    _
  $region9: #{stacn_forward.1} parent=0 // pred_fallthru
    _
  // Predicated region
  $region10: #{stacn_forward.1} parent=0 // pred_check
    _
  $region11: #{stacn_forward.1} parent=0 // pred_check_branch
    %13 = sbr.rel (0) target = $region13
  $region12: #{stacn_forward.1} parent=0 // pred_region
    _
  $region13: #{stacn_forward.1} parent=0 // pred_fallthru
    _
  %v15 = vld [vmem:[%s2] sm:$0x1]
  %v16 = vld [vmem:[%s2 + $0x1] sm:$0x1]
  %v17 = vld [vmem:[%s2 + $0x2] sm:$0x1]
  %v18 = vld [vmem:[%s2 + $0x3] sm:$0x1]
  %v19 = vld [vmem:[%s2 + $0x4] sm:$0x1]
  %v20 = vld [vmem:[%s2 + $0x5] sm:$0x1]
  %v21 = vld [vmem:[%s2 + $0x6] sm:$0x1]
  %v22 = vld [vmem:[%s2 + $0x7] sm:$0x1]
  %v23 = vld [vmem:[%s0] sm:$0xf]
  %v24 = vld [vmem:[%s0 + $0x4] sm:$0xf]
  %v25 = vld [vmem:[%s0 + $0x8] sm:$0xf]
  %v26 = vld [vmem:[%s0 + $0xc] sm:$0xf]
  %v27 = vld [vmem:[%s0 + $0x10] sm:$0xf]
  %v28 = vld [vmem:[%s0 + $0x14] sm:$0xf]
  %v29 = vld [vmem:[%s0 + $0x18] sm:$0xf]
  %v30 = vld [vmem:[%s0 + $0x1c] sm:$0xf]
  %v31 = vld [vmem:[%s0 + $0x20] sm:$0xf]
  %v32 = vld [vmem:[%s0 + $0x24] sm:$0xf]
  %v33 = vld [vmem:[%s0 + $0x28] sm:$0xf]
  %v34 = vld [vmem:[%s0 + $0x2c] sm:$0xf]
  %v35 = vld [vmem:[%s0 + $0x30] sm:$0xf]
  %v36 = vld [vmem:[%s0 + $0x34] sm:$0xf]
  %v37 = vld [vmem:[%s0 + $0x38] sm:$0xf]
  %v38 = vld [vmem:[%s0 + $0x3c] sm:$0xf]
  %v39 = vld [vmem:[%s0 + $0x40] sm:$0xf]
  %v40 = vld [vmem:[%s0 + $0x44] sm:$0xf]
  %v41 = vld [vmem:[%s0 + $0x48] sm:$0xf]
  %v42 = vld [vmem:[%s0 + $0x4c] sm:$0xf]
  %v43 = vld [vmem:[%s0 + $0x50] sm:$0xf]
  %v44 = vld [vmem:[%s0 + $0x54] sm:$0xf]
  %v45 = vld [vmem:[%s0 + $0x58] sm:$0xf]
  %v46 = vld [vmem:[%s0 + $0x5c] sm:$0xf]
  %v47 = vld [vmem:[%s0 + $0x60] sm:$0xf]
  %v48 = vld [vmem:[%s0 + $0x64] sm:$0xf]
  %v49 = vld [vmem:[%s0 + $0x68] sm:$0xf]
  %v50 = vld [vmem:[%s0 + $0x6c] sm:$0xf]
  %v51 = vld [vmem:[%s0 + $0x70] sm:$0xf]
  %v52 = vld [vmem:[%s0 + $0x74] sm:$0xf]
  %v53 = vld [vmem:[%s0 + $0x78] sm:$0xf]
  %v54 = vld [vmem:[%s0 + $0x7c] sm:$0xf]
  %v55 = vld [vmem:[%s1] sm:$0xf]
  %v56 = vld [vmem:[%s1 + $0x4] sm:$0xf]
  %v57 = vld [vmem:[%s1 + $0x8] sm:$0xf]
  %v58 = vld [vmem:[%s1 + $0xc] sm:$0xf]
  %v59 = vld [vmem:[%s1 + $0x10] sm:$0xf]
  %v60 = vld [vmem:[%s1 + $0x14] sm:$0xf]
  %v61 = vld [vmem:[%s1 + $0x18] sm:$0xf]
  %v62 = vld [vmem:[%s1 + $0x1c] sm:$0xf]
  %v63 = vld [vmem:[%s1 + $0x20] sm:$0xf]
  %v64 = vld [vmem:[%s1 + $0x24] sm:$0xf]
  %v65 = vld [vmem:[%s1 + $0x28] sm:$0xf]
  %v66 = vld [vmem:[%s1 + $0x2c] sm:$0xf]
  %v67 = vld [vmem:[%s1 + $0x30] sm:$0xf]
  %v68 = vld [vmem:[%s1 + $0x34] sm:$0xf]
  %v69 = vld [vmem:[%s1 + $0x38] sm:$0xf]
  %v70 = vld [vmem:[%s1 + $0x3c] sm:$0xf]
  %v103 = vunpack.c.l.b16 %v23
  %v104 = vunpack.c.l.b16 %v24
  %v105 = vunpack.c.l.b16 %v25
  %v106 = vunpack.c.l.b16 %v26
  %v107 = vunpack.c.l.b16 %v27
  %v108 = vunpack.c.l.b16 %v28
  %v109 = vunpack.c.l.b16 %v29
  %v110 = vunpack.c.l.b16 %v30
  %v111 = vunpack.c.l.b16 %v31
  %v112 = vunpack.c.l.b16 %v32
  %v113 = vunpack.c.l.b16 %v33
  %v114 = vunpack.c.l.b16 %v34
  %v115 = vunpack.c.l.b16 %v35
  %v116 = vunpack.c.l.b16 %v36
  %v117 = vunpack.c.l.b16 %v37
  %v118 = vunpack.c.l.b16 %v38
  %v119 = vunpack.c.l.b16 %v39
  %v120 = vunpack.c.l.b16 %v40
  %v121 = vunpack.c.l.b16 %v41
  %v122 = vunpack.c.l.b16 %v42
  %v123 = vunpack.c.l.b16 %v43
  %v124 = vunpack.c.l.b16 %v44
  %v125 = vunpack.c.l.b16 %v45
  %v126 = vunpack.c.l.b16 %v46
  %v127 = vunpack.c.l.b16 %v47
  %v128 = vunpack.c.l.b16 %v48
  %v129 = vunpack.c.l.b16 %v49
  %v130 = vunpack.c.l.b16 %v50
  %v131 = vunpack.c.l.b16 %v51
  %v132 = vunpack.c.l.b16 %v52
  %v133 = vunpack.c.l.b16 %v53
  %v134 = vunpack.c.l.b16 %v54
  %v135 = vpack.c.b16 %v104, %v103
  %v136 = vpack.c.b16 %v106, %v105
  %v137 = vpack.c.b16 %v108, %v107
  %v138 = vpack.c.b16 %v110, %v109
  %v139 = vpack.c.b16 %v112, %v111
  %v140 = vpack.c.b16 %v114, %v113
  %v141 = vpack.c.b16 %v116, %v115
  %v142 = vpack.c.b16 %v118, %v117
  %v143 = vpack.c.b16 %v120, %v119
  %v144 = vpack.c.b16 %v122, %v121
  %v145 = vpack.c.b16 %v124, %v123
  %v146 = vpack.c.b16 %v126, %v125
  %v147 = vpack.c.b16 %v128, %v127
  %v148 = vpack.c.b16 %v130, %v129
  %v149 = vpack.c.b16 %v132, %v131
  %v150 = vpack.c.b16 %v134, %v133
  %v183 = vunpack.c.l.b16 %v55
  %v184 = vunpack.c.l.b16 %v56
  %v185 = vunpack.c.l.b16 %v57
  %v186 = vunpack.c.l.b16 %v58
  %v187 = vunpack.c.l.b16 %v59
  %v188 = vunpack.c.l.b16 %v60
  %v189 = vunpack.c.l.b16 %v61
  %v190 = vunpack.c.l.b16 %v62
  %v191 = vunpack.c.l.b16 %v63
  %v192 = vunpack.c.l.b16 %v64
  %v193 = vunpack.c.l.b16 %v65
  %v194 = vunpack.c.l.b16 %v66
  %v195 = vunpack.c.l.b16 %v67
  %v196 = vunpack.c.l.b16 %v68
  %v197 = vunpack.c.l.b16 %v69
  %v198 = vunpack.c.l.b16 %v70
  %v199 = vpack.c.b16 %v184, %v183
  %v200 = vpack.c.b16 %v186, %v185
  %v201 = vpack.c.b16 %v188, %v187
  %v202 = vpack.c.b16 %v190, %v189
  %v203 = vpack.c.b16 %v192, %v191
  %v204 = vpack.c.b16 %v194, %v193
  %v205 = vpack.c.b16 %v196, %v195
  %v206 = vpack.c.b16 %v198, %v197
  %215 = vmatpush.bf16.msra.mxu0 %v206
  %216 = vmatpush.bf16.msra.mxu0 %v205
  %217 = vmatpush.bf16.msra.mxu0 %v204
  %218 = vmatpush.bf16.msra.mxu0 %v203
  %219 = vmatpush.bf16.msra.mxu0 %v202
  %220 = vmatpush.bf16.msra.mxu0 %v201
  %221 = vmatpush.bf16.msra.mxu0 %v200
  %222 = vmatpush.bf16.msra.mxu0 %v199
  %223 = vmatmul.bf16.gmra.mxu0 %v135
  %v224 = vpop.f32.mrf.mxu0
  %v225 = vadd.f32 0.0, %v224
  %v226 = vpop.f32.mrf.mxu0
  %v227 = vadd.f32 0.0, %v226
  %228 = vmatmul.bf16.gmra.mxu0 %v136
  %v229 = vpop.f32.mrf.mxu0
  %v230 = vadd.f32 0.0, %v229
  %v231 = vpop.f32.mrf.mxu0
  %v232 = vadd.f32 0.0, %v231
  %233 = vmatmul.bf16.gmra.mxu0 %v137
  %v234 = vpop.f32.mrf.mxu0
  %v235 = vadd.f32 0.0, %v234
  %v236 = vpop.f32.mrf.mxu0
  %v237 = vadd.f32 0.0, %v236
  %238 = vmatmul.bf16.gmra.mxu0 %v138
  %v239 = vpop.f32.mrf.mxu0
  %v240 = vadd.f32 0.0, %v239
  %v241 = vpop.f32.mrf.mxu0
  %v242 = vadd.f32 0.0, %v241
  %243 = vmatmul.bf16.gmra.mxu0 %v139
  %v244 = vpop.f32.mrf.mxu0
  %v245 = vadd.f32 0.0, %v244
  %v246 = vpop.f32.mrf.mxu0
  %v247 = vadd.f32 0.0, %v246
  %248 = vmatmul.bf16.gmra.mxu0 %v140
  %v249 = vpop.f32.mrf.mxu0
  %v250 = vadd.f32 0.0, %v249
  %v251 = vpop.f32.mrf.mxu0
  %v252 = vadd.f32 0.0, %v251
  %253 = vmatmul.bf16.gmra.mxu0 %v141
  %v254 = vpop.f32.mrf.mxu0
  %v255 = vadd.f32 0.0, %v254
  %v256 = vpop.f32.mrf.mxu0
  %v257 = vadd.f32 0.0, %v256
  %258 = vmatmul.bf16.gmra.mxu0 %v142
  %v259 = vpop.f32.mrf.mxu0
  %v260 = vadd.f32 0.0, %v259
  %v261 = vpop.f32.mrf.mxu0
  %v262 = vadd.f32 0.0, %v261
  %263 = vmatmul.bf16.gmra.mxu0 %v143
  %v264 = vpop.f32.mrf.mxu0
  %v265 = vadd.f32 0.0, %v264
  %v266 = vpop.f32.mrf.mxu0
  %v267 = vadd.f32 0.0, %v266
  %268 = vmatmul.bf16.gmra.mxu0 %v144
  %v269 = vpop.f32.mrf.mxu0
  %v270 = vadd.f32 0.0, %v269
  %v271 = vpop.f32.mrf.mxu0
  %v272 = vadd.f32 0.0, %v271
  %273 = vmatmul.bf16.gmra.mxu0 %v145
  %v274 = vpop.f32.mrf.mxu0
  %v275 = vadd.f32 0.0, %v274
  %v276 = vpop.f32.mrf.mxu0
  %v277 = vadd.f32 0.0, %v276
  %278 = vmatmul.bf16.gmra.mxu0 %v146
  %v279 = vpop.f32.mrf.mxu0
  %v280 = vadd.f32 0.0, %v279
  %v281 = vpop.f32.mrf.mxu0
  %v282 = vadd.f32 0.0, %v281
  %283 = vmatmul.bf16.gmra.mxu0 %v147
  %v284 = vpop.f32.mrf.mxu0
  %v285 = vadd.f32 0.0, %v284
  %v286 = vpop.f32.mrf.mxu0
  %v287 = vadd.f32 0.0, %v286
  %288 = vmatmul.bf16.gmra.mxu0 %v148
  %v289 = vpop.f32.mrf.mxu0
  %v290 = vadd.f32 0.0, %v289
  %v291 = vpop.f32.mrf.mxu0
  %v292 = vadd.f32 0.0, %v291
  %293 = vmatmul.bf16.gmra.mxu0 %v149
  %v294 = vpop.f32.mrf.mxu0
  %v295 = vadd.f32 0.0, %v294
  %v296 = vpop.f32.mrf.mxu0
  %v297 = vadd.f32 0.0, %v296
  %298 = vmatmul.bf16.gmra.mxu0 %v150
  %v299 = vpop.f32.mrf.mxu0
  %v300 = vadd.f32 0.0, %v299
  %v301 = vpop.f32.mrf.mxu0
  %v302 = vadd.f32 0.0, %v301
  %303 = vdwg.mxu0
  %v304 = vperm.slane %v15, 0
  %v305 = vmul.f32 %v225, %v304
  %v306 = vmul.f32 %v227, %v304
  %v307 = vmul.f32 %v230, %v304
  %v308 = vmul.f32 %v232, %v304
  %v309 = vmul.f32 %v235, %v304
  %v310 = vmul.f32 %v237, %v304
  %v311 = vmul.f32 %v240, %v304
  %v312 = vmul.f32 %v242, %v304
  %v313 = vmul.f32 %v245, %v304
  %v314 = vmul.f32 %v247, %v304
  %v315 = vmul.f32 %v250, %v304
  %v316 = vmul.f32 %v252, %v304
  %v317 = vmul.f32 %v255, %v304
  %v318 = vmul.f32 %v257, %v304
  %v319 = vmul.f32 %v260, %v304
  %v320 = vmul.f32 %v262, %v304
  %v321 = vmul.f32 %v265, %v304
  %v322 = vmul.f32 %v267, %v304
  %v323 = vmul.f32 %v270, %v304
  %v324 = vmul.f32 %v272, %v304
  %v325 = vmul.f32 %v275, %v304
  %v326 = vmul.f32 %v277, %v304
  %v327 = vmul.f32 %v280, %v304
  %v328 = vmul.f32 %v282, %v304
  %v329 = vmul.f32 %v285, %v304
  %v330 = vmul.f32 %v287, %v304
  %v331 = vmul.f32 %v290, %v304
  %v332 = vmul.f32 %v292, %v304
  %v333 = vmul.f32 %v295, %v304
  %v334 = vmul.f32 %v297, %v304
  %v335 = vmul.f32 %v300, %v304
  %v336 = vmul.f32 %v302, %v304
  %v337 = vperm.slane %v16, 0
  %v338 = vadd.f32 %v305, %v337
  %v339 = vadd.f32 %v306, %v337
  %v340 = vadd.f32 %v307, %v337
  %v341 = vadd.f32 %v308, %v337
  %v342 = vadd.f32 %v309, %v337
  %v343 = vadd.f32 %v310, %v337
  %v344 = vadd.f32 %v311, %v337
  %v345 = vadd.f32 %v312, %v337
  %v346 = vadd.f32 %v313, %v337
  %v347 = vadd.f32 %v314, %v337
  %v348 = vadd.f32 %v315, %v337
  %v349 = vadd.f32 %v316, %v337
  %v350 = vadd.f32 %v317, %v337
  %v351 = vadd.f32 %v318, %v337
  %v352 = vadd.f32 %v319, %v337
  %v353 = vadd.f32 %v320, %v337
  %v354 = vadd.f32 %v321, %v337
  %v355 = vadd.f32 %v322, %v337
  %v356 = vadd.f32 %v323, %v337
  %v357 = vadd.f32 %v324, %v337
  %v358 = vadd.f32 %v325, %v337
  %v359 = vadd.f32 %v326, %v337
  %v360 = vadd.f32 %v327, %v337
  %v361 = vadd.f32 %v328, %v337
  %v362 = vadd.f32 %v329, %v337
  %v363 = vadd.f32 %v330, %v337
  %v364 = vadd.f32 %v331, %v337
  %v365 = vadd.f32 %v332, %v337
  %v366 = vadd.f32 %v333, %v337
  %v367 = vadd.f32 %v334, %v337
  %v368 = vadd.f32 %v335, %v337
  %v369 = vadd.f32 %v336, %v337
  %v370 = vmax.f32 %v338, 0.0
  %v371 = vmax.f32 %v339, 0.0
  %v372 = vmax.f32 %v340, 0.0
  %v373 = vmax.f32 %v341, 0.0
  %v374 = vmax.f32 %v342, 0.0
  %v375 = vmax.f32 %v343, 0.0
  %v376 = vmax.f32 %v344, 0.0
  %v377 = vmax.f32 %v345, 0.0
  %v378 = vmax.f32 %v346, 0.0
  %v379 = vmax.f32 %v347, 0.0
  %v380 = vmax.f32 %v348, 0.0
  %v381 = vmax.f32 %v349, 0.0
  %v382 = vmax.f32 %v350, 0.0
  %v383 = vmax.f32 %v351, 0.0
  %v384 = vmax.f32 %v352, 0.0
  %v385 = vmax.f32 %v353, 0.0
  %v386 = vmax.f32 %v354, 0.0
  %v387 = vmax.f32 %v355, 0.0
  %v388 = vmax.f32 %v356, 0.0
  %v389 = vmax.f32 %v357, 0.0
  %v390 = vmax.f32 %v358, 0.0
  %v391 = vmax.f32 %v359, 0.0
  %v392 = vmax.f32 %v360, 0.0
  %v393 = vmax.f32 %v361, 0.0
  %v394 = vmax.f32 %v362, 0.0
  %v395 = vmax.f32 %v363, 0.0
  %v396 = vmax.f32 %v364, 0.0
  %v397 = vmax.f32 %v365, 0.0
  %v398 = vmax.f32 %v366, 0.0
  %v399 = vmax.f32 %v367, 0.0
  %v400 = vmax.f32 %v368, 0.0
  %v401 = vmax.f32 %v369, 0.0
  %v402 = vmax.f32 %v370, %v378
  %v403 = vmax.f32 %v402, %v386
  %v404 = vmax.f32 %v403, %v394
  %v405 = vmax.f32 %v371, %v379
  %v406 = vmax.f32 %v405, %v387
  %v407 = vmax.f32 %v406, %v395
  %v408 = vmax.f32 %v372, %v380
  %v409 = vmax.f32 %v408, %v388
  %v410 = vmax.f32 %v409, %v396
  %v411 = vmax.f32 %v373, %v381
  %v412 = vmax.f32 %v411, %v389
  %v413 = vmax.f32 %v412, %v397
  %v414 = vmax.f32 %v374, %v382
  %v415 = vmax.f32 %v414, %v390
  %v416 = vmax.f32 %v415, %v398
  %v417 = vmax.f32 %v375, %v383
  %v418 = vmax.f32 %v417, %v391
  %v419 = vmax.f32 %v418, %v399
  %v420 = vmax.f32 %v376, %v384
  %v421 = vmax.f32 %v420, %v392
  %v422 = vmax.f32 %v421, %v400
  %v423 = vmax.f32 %v377, %v385
  %v424 = vmax.f32 %v423, %v393
  %v425 = vmax.f32 %v424, %v401
  %v426 = vadd.f32 %v404, %v407
  %v427 = vadd.f32 %v426, %v410
  %v428 = vadd.f32 %v427, %v413
  %v429 = vrot.slane %v428, 4
  %v430 = vadd.f32 %v428, %v429
  %v431 = vrot.slane %v430, 2
  %v432 = vadd.f32 %v430, %v431
  %v433 = vrot.slane %v432, 1
  %v434 = vadd.f32 %v432, %v433
  %v435 = vadd.f32 %v416, %v419
  %v436 = vadd.f32 %v435, %v422
  %v437 = vadd.f32 %v436, %v425
  %v438 = vrot.slane %v437, 4
  %v439 = vadd.f32 %v437, %v438
  %v440 = vrot.slane %v439, 2
  %v441 = vadd.f32 %v439, %v440
  %v442 = vrot.slane %v441, 1
  %v443 = vadd.f32 %v441, %v442
  %v444 = vld [vmem:[%s0 + $0x80] sm:$0xf]
  %v445 = vld [vmem:[%s0 + $0x84] sm:$0xf]
  %v446 = vld [vmem:[%s1 + $0x40] sm:$0xf]
  %v447 = vld [vmem:[%s1 + $0x44] sm:$0xf]
  %v448 = vld [vmem:[%s1 + $0x48] sm:$0xf]
  %v449 = vld [vmem:[%s1 + $0x4c] sm:$0xf]
  %v450 = vld [vmem:[%s1 + $0x50] sm:$0xf]
  %v451 = vld [vmem:[%s1 + $0x54] sm:$0xf]
  %v452 = vld [vmem:[%s1 + $0x58] sm:$0xf]
  %v453 = vld [vmem:[%s1 + $0x5c] sm:$0xf]
  %v454 = vld [vmem:[%s1 + $0x60] sm:$0xf]
  %v455 = vld [vmem:[%s1 + $0x64] sm:$0xf]
  %v456 = vld [vmem:[%s1 + $0x68] sm:$0xf]
  %v457 = vld [vmem:[%s1 + $0x6c] sm:$0xf]
  %v458 = vld [vmem:[%s1 + $0x70] sm:$0xf]
  %v459 = vld [vmem:[%s1 + $0x74] sm:$0xf]
  %v460 = vld [vmem:[%s1 + $0x78] sm:$0xf]
  %v461 = vld [vmem:[%s1 + $0x7c] sm:$0xf]
  %v462 = vperm.slane %v17, 0
  %v465 = vunpack.c.l.b16 %v444
  %v466 = vunpack.c.l.b16 %v445
  %v467 = vpack.c.b16 %v466, %v465
  %v485 = vunpack.c.l.b16 %v446
  %v486 = vunpack.c.l.b16 %v447
  %v487 = vunpack.c.l.b16 %v448
  %v488 = vunpack.c.l.b16 %v449
  %v489 = vunpack.c.l.b16 %v450
  %v490 = vunpack.c.l.b16 %v451
  %v491 = vunpack.c.l.b16 %v452
  %v492 = vunpack.c.l.b16 %v453
  %v493 = vunpack.c.l.b16 %v454
  %v494 = vunpack.c.l.b16 %v455
  %v495 = vunpack.c.l.b16 %v456
  %v496 = vunpack.c.l.b16 %v457
  %v497 = vunpack.c.l.b16 %v458
  %v498 = vunpack.c.l.b16 %v459
  %v499 = vunpack.c.l.b16 %v460
  %v500 = vunpack.c.l.b16 %v461
  %v501 = vpack.c.b16 %v486, %v485
  %v502 = vpack.c.b16 %v488, %v487
  %v503 = vpack.c.b16 %v490, %v489
  %v504 = vpack.c.b16 %v492, %v491
  %v505 = vpack.c.b16 %v494, %v493
  %v506 = vpack.c.b16 %v496, %v495
  %v507 = vpack.c.b16 %v498, %v497
  %v508 = vpack.c.b16 %v500, %v499
  %517 = vmatpush.bf16.msra.mxu0 %v508
  %518 = vmatpush.bf16.msra.mxu0 %v507
  %519 = vmatpush.bf16.msra.mxu0 %v506
  %520 = vmatpush.bf16.msra.mxu0 %v505
  %521 = vmatpush.bf16.msra.mxu0 %v504
  %522 = vmatpush.bf16.msra.mxu0 %v503
  %523 = vmatpush.bf16.msra.mxu0 %v502
  %524 = vmatpush.bf16.msra.mxu0 %v501
  %525 = vmatmul.bf16.gmra.mxu0 %v467
  %v526 = vpop.f32.mrf.mxu0
  %v527 = vadd.f32 %v462, %v526
  %v528 = vpop.f32.mrf.mxu0
  %v529 = vadd.f32 %v462, %v528
  %530 = vdwg.mxu0
  %v533 = vrot.slane %v527, 2
  %v534 = vrot.slane %v527, 4
  %v535 = vrot.slane %v527, 6
  %v536 = vrot.slane %v529, 2
  %v537 = vrot.slane %v529, 4
  %v538 = vrot.slane %v529, 6
  %v545 = vld [vmem:[%s1 + $0x80] sm:$0xf]
  %v546 = vld [vmem:[%s1 + $0x84] sm:$0xf]
  %v547 = vld [vmem:[%s1 + $0x88] sm:$0xf]
  %v548 = vld [vmem:[%s1 + $0x8c] sm:$0xf]
  %v549 = vld [vmem:[%s1 + $0x90] sm:$0xf]
  %v550 = vld [vmem:[%s1 + $0x94] sm:$0xf]
  %v551 = vld [vmem:[%s1 + $0x98] sm:$0xf]
  %v552 = vld [vmem:[%s1 + $0x9c] sm:$0xf]
  %v553 = vld [vmem:[%s1 + $0xa0] sm:$0xf]
  %v554 = vld [vmem:[%s1 + $0xa4] sm:$0xf]
  %v555 = vld [vmem:[%s1 + $0xa8] sm:$0xf]
  %v556 = vld [vmem:[%s1 + $0xac] sm:$0xf]
  %v561 = vunpack.c.l.b16 %v545
  %v562 = vunpack.c.l.b16 %v546
  %v563 = vunpack.c.l.b16 %v547
  %v564 = vunpack.c.l.b16 %v548
  %v565 = vpack.c.b16 %v562, %v561
  %v566 = vpack.c.b16 %v564, %v563
  %vm569 = vcmask 261120
  %v571 = vsel %vm569, 0, 0
  %573 = vmatpush.bf16.msra.mxu0 0
  %574 = vmatpush.bf16.msra.mxu0 0
  %575 = vmatpush.bf16.msra.mxu0 0
  %576 = vmatpush.bf16.msra.mxu0 0
  %577 = vmatpush.bf16.msra.mxu0 0
  %578 = vmatpush.bf16.msra.mxu0 0
  %579 = vmatpush.bf16.msra.mxu0 %v566
  %580 = vmatpush.bf16.msra.mxu0 %v565
  %581 = vmatmul.bf16.gmra.mxu0 %v571
  %v582 = vpop.f32.mrf.mxu0
  %v583 = vadd.f32 0.0, %v582
  %v584 = vpop.f32.mrf.mxu0
  %585 = vdwg.mxu0
  %v586 = vadd.f32 %v527, %v583
  %v587 = vxor.u32 %v586, 2147483648
  %v588 = vmul.f32 %v587, 1.442695
  %v589 = vpow.pop %v588
  %v590 = vadd.f32 %v589, 1.0
  %v591 = vrcp.pop %v590
  %v592 = vmul.f32 %v590, %v591
  %v593 = vsub.f32 1.0, %v592
  %v594 = vmul.f32 %v591, %v593
  %v595 = vadd.f32 %v591, %v594
  %vm596 = vweird.f32 %v590
  %vm597 = vweird.f32 %v591
  %vm598 = vmor %vm596, %vm597
  %v599 = vsel %vm598, %v591, %v595
  %v600 = vand.u32 2147483647, %v590
  %vm601 = vcmp.eq.f32.partialorder %v600, 8.507059e+37
  %v602 = vand.u32 %v590, 2147483648
  %v603 = vor.u32 1.1754944e-38, %v602
  %v604 = vsel %vm601, %v603, %v599
  %v605 = vmul.f32 1.0, %v604
  %v606 = vtanh.pop %v586
  %v607 = vmul.f32 %v605, 0.0
  %609 = vrot.lane.b32.xlu0 %v606, 64
  %v610 = vpop.permute.xlu0 %609
  %v612 = vmul.f32 %v605, %v610
  %614 = vrot.lane.b32.xlu0 %v612, 32
  %v615 = vpop.permute.xlu0 %614
  %v617 = vadd.f32 %v607, %v615
  %v618 = vtanh.pop %v617
  %620 = vrot.lane.b32.xlu0 %v618, 64
  %v621 = vpop.permute.xlu0 %620
  %v623 = vmul.f32 %v605, %v621
  %625 = vst [vmem:[#allocation1] ss:$4 sm:$0xff] %v623
  %v626 = vld.sshfl [vmem:[#allocation1] sm:$0xff pattern:$0x73625140]
  %627 = vrot.lane.b32.xlu0 %v626, 32
  %v628 = vpop.permute.xlu0 %627
  %v630 = vsel %vm569, %v628, 0.0
  %v631 = vpack.c.bf16 %v630, %v630
  %v632 = vperm.slane %v18, 0
  %v641 = vunpack.c.l.b16 %v549
  %v642 = vunpack.c.l.b16 %v550
  %v643 = vunpack.c.l.b16 %v551
  %v644 = vunpack.c.l.b16 %v552
  %v645 = vunpack.c.l.b16 %v553
  %v646 = vunpack.c.l.b16 %v554
  %v647 = vunpack.c.l.b16 %v555
  %v648 = vunpack.c.l.b16 %v556
  %v649 = vpack.c.b16 %v642, %v641
  %v650 = vpack.c.b16 %v644, %v643
  %v651 = vpack.c.b16 %v646, %v645
  %v652 = vpack.c.b16 %v648, %v647
  %vm657 = vcmask 523264
  %v659 = vsel %vm657, %v631, 0
  %661 = vmatpush.bf16.msra.mxu0 0
  %662 = vmatpush.bf16.msra.mxu0 0
  %663 = vmatpush.bf16.msra.mxu0 0
  %664 = vmatpush.bf16.msra.mxu0 0
  %665 = vmatpush.bf16.msra.mxu0 %v652
  %666 = vmatpush.bf16.msra.mxu0 %v651
  %667 = vmatpush.bf16.msra.mxu0 %v650
  %668 = vmatpush.bf16.msra.mxu0 %v649
  %669 = vmatmul.bf16.gmra.mxu0 %v659
  %v670 = vpop.f32.mrf.mxu0
  %v671 = vadd.f32 %v632, %v670
  %v672 = vpop.f32.mrf.mxu0
  %673 = vdwg.mxu0
  %v674 = vxor.u32 %v671, 2147483648
  %v675 = vmul.f32 %v674, 1.442695
  %v676 = vpow.pop %v675
  %v677 = vadd.f32 %v676, 1.0
  %v678 = vrcp.pop %v677
  %v679 = vmul.f32 %v677, %v678
  %v680 = vsub.f32 1.0, %v679
  %v681 = vmul.f32 %v678, %v680
  %v682 = vadd.f32 %v678, %v681
  %vm683 = vweird.f32 %v677
  %vm684 = vweird.f32 %v678
  %vm685 = vmor %vm683, %vm684
  %v686 = vsel %vm685, %v678, %v682
  %v687 = vand.u32 2147483647, %v677
  %vm688 = vcmp.eq.f32.partialorder %v687, 8.507059e+37
  %v689 = vand.u32 %v677, 2147483648
  %v690 = vor.u32 1.1754944e-38, %v689
  %v691 = vsel %vm688, %v690, %v686
  %v692 = vmul.f32 1.0, %v691
  %v693 = vtanh.pop %v671
  %v694 = vmul.f32 %v692, 0.0
  %696 = vrot.lane.b32.xlu0 %v693, 64
  %v697 = vpop.permute.xlu0 %696
  %v699 = vmul.f32 %v692, %v697
  %701 = vrot.lane.b32.xlu0 %v699, 32
  %v702 = vpop.permute.xlu0 %701
  %v704 = vadd.f32 %v694, %v702
  %v705 = vtanh.pop %v704
  %707 = vrot.lane.b32.xlu0 %v705, 64
  %v708 = vpop.permute.xlu0 %707
  %v710 = vmul.f32 %v692, %v708
  %v711 = vpack.c.bf16 %v623, %v623
  %713 = vrot.lane.b32.xlu0 %v711, 32
  %v714 = vpop.permute.xlu0 %713
  %v716 = vsel %vm569, %v714, 0
  %718 = vmatpush.bf16.msra.mxu0 0
  %719 = vmatpush.bf16.msra.mxu0 0
  %720 = vmatpush.bf16.msra.mxu0 0
  %721 = vmatpush.bf16.msra.mxu0 0
  %722 = vmatpush.bf16.msra.mxu0 0
  %723 = vmatpush.bf16.msra.mxu0 0
  %724 = vmatpush.bf16.msra.mxu0 %v566
  %725 = vmatpush.bf16.msra.mxu0 %v565
  %726 = vmatmul.bf16.gmra.mxu0 %v716
  %v727 = vpop.f32.mrf.mxu0
  %v728 = vadd.f32 0.0, %v727
  %v729 = vpop.f32.mrf.mxu0
  %730 = vdwg.mxu0
  %v731 = vadd.f32 %v533, %v728
  %v732 = vxor.u32 %v731, 2147483648
  %v733 = vmul.f32 %v732, 1.442695
  %v734 = vpow.pop %v733
  %v735 = vadd.f32 %v734, 1.0
  %v736 = vrcp.pop %v735
  %v737 = vmul.f32 %v735, %v736
  %v738 = vsub.f32 1.0, %v737
  %v739 = vmul.f32 %v736, %v738
  %v740 = vadd.f32 %v736, %v739
  %vm741 = vweird.f32 %v735
  %vm742 = vweird.f32 %v736
  %vm743 = vmor %vm741, %vm742
  %v744 = vsel %vm743, %v736, %v740
  %v745 = vand.u32 2147483647, %v735
  %vm746 = vcmp.eq.f32.partialorder %v745, 8.507059e+37
  %v747 = vand.u32 %v735, 2147483648
  %v748 = vor.u32 1.1754944e-38, %v747
  %v749 = vsel %vm746, %v748, %v744
  %v750 = vmul.f32 1.0, %v749
  %v751 = vtanh.pop %v731
  %v752 = vmul.f32 %v750, %v617
  %754 = vrot.lane.b32.xlu0 %v751, 64
  %v755 = vpop.permute.xlu0 %754
  %v757 = vmul.f32 %v750, %v755
  %759 = vrot.lane.b32.xlu0 %v757, 32
  %v760 = vpop.permute.xlu0 %759
  %v762 = vadd.f32 %v752, %v760
  %v763 = vtanh.pop %v762
  %765 = vrot.lane.b32.xlu0 %v763, 64
  %v766 = vpop.permute.xlu0 %765
  %v768 = vmul.f32 %v750, %v766
  %770 = vst [vmem:[#allocation1] ss:$4 sm:$0xff] %v768
  %v771 = vld.sshfl [vmem:[#allocation1] sm:$0xff pattern:$0x73625140]
  %772 = vrot.lane.b32.xlu0 %v771, 32
  %v773 = vpop.permute.xlu0 %772
  %776 = vrot.lane.b32.xlu0 %v710, 64
  %v777 = vpop.permute.xlu0 %776
  %v779 = vsel %vm569, %v773, %v777
  %v780 = vpack.c.bf16 %v779, %v779
  %v782 = vsel %vm657, %v780, 0
  %784 = vmatpush.bf16.msra.mxu0 0
  %785 = vmatpush.bf16.msra.mxu0 0
  %786 = vmatpush.bf16.msra.mxu0 0
  %787 = vmatpush.bf16.msra.mxu0 0
  %788 = vmatpush.bf16.msra.mxu0 %v652
  %789 = vmatpush.bf16.msra.mxu0 %v651
  %790 = vmatpush.bf16.msra.mxu0 %v650
  %791 = vmatpush.bf16.msra.mxu0 %v649
  %792 = vmatmul.bf16.gmra.mxu0 %v782
  %v793 = vpop.f32.mrf.mxu0
  %v794 = vadd.f32 %v632, %v793
  %v795 = vpop.f32.mrf.mxu0
  %796 = vdwg.mxu0
  %v797 = vxor.u32 %v794, 2147483648
  %v798 = vmul.f32 %v797, 1.442695
  %v799 = vpow.pop %v798
  %v800 = vadd.f32 %v799, 1.0
  %v801 = vrcp.pop %v800
  %v802 = vmul.f32 %v800, %v801
  %v803 = vsub.f32 1.0, %v802
  %v804 = vmul.f32 %v801, %v803
  %v805 = vadd.f32 %v801, %v804
  %vm806 = vweird.f32 %v800
  %vm807 = vweird.f32 %v801
  %vm808 = vmor %vm806, %vm807
  %v809 = vsel %vm808, %v801, %v805
  %v810 = vand.u32 2147483647, %v800
  %vm811 = vcmp.eq.f32.partialorder %v810, 8.507059e+37
  %v812 = vand.u32 %v800, 2147483648
  %v813 = vor.u32 1.1754944e-38, %v812
  %v814 = vsel %vm811, %v813, %v809
  %v815 = vmul.f32 1.0, %v814
  %v816 = vtanh.pop %v794
  %v817 = vmul.f32 %v815, %v704
  %819 = vrot.lane.b32.xlu0 %v816, 64
  %v820 = vpop.permute.xlu0 %819
  %v822 = vmul.f32 %v815, %v820
  %824 = vrot.lane.b32.xlu0 %v822, 32
  %v825 = vpop.permute.xlu0 %824
  %v827 = vadd.f32 %v817, %v825
  %v828 = vtanh.pop %v827
  %830 = vrot.lane.b32.xlu0 %v828, 64
  %v831 = vpop.permute.xlu0 %830
  %v833 = vmul.f32 %v815, %v831
  %v834 = vpack.c.bf16 %v768, %v768
  %836 = vrot.lane.b32.xlu0 %v834, 32
  %v837 = vpop.permute.xlu0 %836
  %v839 = vsel %vm569, %v837, 0
  %841 = vmatpush.bf16.msra.mxu0 0
  %842 = vmatpush.bf16.msra.mxu0 0
  %843 = vmatpush.bf16.msra.mxu0 0
  %844 = vmatpush.bf16.msra.mxu0 0
  %845 = vmatpush.bf16.msra.mxu0 0
  %846 = vmatpush.bf16.msra.mxu0 0
  %847 = vmatpush.bf16.msra.mxu0 %v566
  %848 = vmatpush.bf16.msra.mxu0 %v565
  %849 = vmatmul.bf16.gmra.mxu0 %v839
  %v850 = vpop.f32.mrf.mxu0
  %v851 = vadd.f32 0.0, %v850
  %v852 = vpop.f32.mrf.mxu0
  %853 = vdwg.mxu0
  %v854 = vadd.f32 %v534, %v851
  %v855 = vxor.u32 %v854, 2147483648
  %v856 = vmul.f32 %v855, 1.442695
  %v857 = vpow.pop %v856
  %v858 = vadd.f32 %v857, 1.0
  %v859 = vrcp.pop %v858
  %v860 = vmul.f32 %v858, %v859
  %v861 = vsub.f32 1.0, %v860
  %v862 = vmul.f32 %v859, %v861
  %v863 = vadd.f32 %v859, %v862
  %vm864 = vweird.f32 %v858
  %vm865 = vweird.f32 %v859
  %vm866 = vmor %vm864, %vm865
  %v867 = vsel %vm866, %v859, %v863
  %v868 = vand.u32 2147483647, %v858
  %vm869 = vcmp.eq.f32.partialorder %v868, 8.507059e+37
  %v870 = vand.u32 %v858, 2147483648
  %v871 = vor.u32 1.1754944e-38, %v870
  %v872 = vsel %vm869, %v871, %v867
  %v873 = vmul.f32 1.0, %v872
  %v874 = vtanh.pop %v854
  %v875 = vmul.f32 %v873, %v762
  %877 = vrot.lane.b32.xlu0 %v874, 64
  %v878 = vpop.permute.xlu0 %877
  %v880 = vmul.f32 %v873, %v878
  %882 = vrot.lane.b32.xlu0 %v880, 32
  %v883 = vpop.permute.xlu0 %882
  %v885 = vadd.f32 %v875, %v883
  %v886 = vtanh.pop %v885
  %888 = vrot.lane.b32.xlu0 %v886, 64
  %v889 = vpop.permute.xlu0 %888
  %v891 = vmul.f32 %v873, %v889
  %893 = vst [vmem:[#allocation1] ss:$4 sm:$0xff] %v891
  %v894 = vld.sshfl [vmem:[#allocation1] sm:$0xff pattern:$0x73625140]
  %895 = vrot.lane.b32.xlu0 %v894, 32
  %v896 = vpop.permute.xlu0 %895
  %899 = vrot.lane.b32.xlu0 %v833, 64
  %v900 = vpop.permute.xlu0 %899
  %v902 = vsel %vm569, %v896, %v900
  %v903 = vpack.c.bf16 %v902, %v902
  %v905 = vsel %vm657, %v903, 0
  %907 = vmatpush.bf16.msra.mxu0 0
  %908 = vmatpush.bf16.msra.mxu0 0
  %909 = vmatpush.bf16.msra.mxu0 0
  %910 = vmatpush.bf16.msra.mxu0 0
  %911 = vmatpush.bf16.msra.mxu0 %v652
  %912 = vmatpush.bf16.msra.mxu0 %v651
  %913 = vmatpush.bf16.msra.mxu0 %v650
  %914 = vmatpush.bf16.msra.mxu0 %v649
  %915 = vmatmul.bf16.gmra.mxu0 %v905
  %v916 = vpop.f32.mrf.mxu0
  %v917 = vadd.f32 %v632, %v916
  %v918 = vpop.f32.mrf.mxu0
  %919 = vdwg.mxu0
  %v920 = vxor.u32 %v917, 2147483648
  %v921 = vmul.f32 %v920, 1.442695
  %v922 = vpow.pop %v921
  %v923 = vadd.f32 %v922, 1.0
  %v924 = vrcp.pop %v923
  %v925 = vmul.f32 %v923, %v924
  %v926 = vsub.f32 1.0, %v925
  %v927 = vmul.f32 %v924, %v926
  %v928 = vadd.f32 %v924, %v927
  %vm929 = vweird.f32 %v923
  %vm930 = vweird.f32 %v924
  %vm931 = vmor %vm929, %vm930
  %v932 = vsel %vm931, %v924, %v928
  %v933 = vand.u32 2147483647, %v923
  %vm934 = vcmp.eq.f32.partialorder %v933, 8.507059e+37
  %v935 = vand.u32 %v923, 2147483648
  %v936 = vor.u32 1.1754944e-38, %v935
  %v937 = vsel %vm934, %v936, %v932
  %v938 = vmul.f32 1.0, %v937
  %v939 = vtanh.pop %v917
  %v940 = vmul.f32 %v938, %v827
  %942 = vrot.lane.b32.xlu0 %v939, 64
  %v943 = vpop.permute.xlu0 %942
  %v945 = vmul.f32 %v938, %v943
  %947 = vrot.lane.b32.xlu0 %v945, 32
  %v948 = vpop.permute.xlu0 %947
  %v950 = vadd.f32 %v940, %v948
  %v951 = vtanh.pop %v950
  %953 = vrot.lane.b32.xlu0 %v951, 64
  %v954 = vpop.permute.xlu0 %953
  %v956 = vmul.f32 %v938, %v954
  %v957 = vpack.c.bf16 %v891, %v891
  %959 = vrot.lane.b32.xlu0 %v957, 32
  %v960 = vpop.permute.xlu0 %959
  %v962 = vsel %vm569, %v960, 0
  %964 = vmatpush.bf16.msra.mxu0 0
  %965 = vmatpush.bf16.msra.mxu0 0
  %966 = vmatpush.bf16.msra.mxu0 0
  %967 = vmatpush.bf16.msra.mxu0 0
  %968 = vmatpush.bf16.msra.mxu0 0
  %969 = vmatpush.bf16.msra.mxu0 0
  %970 = vmatpush.bf16.msra.mxu0 %v566
  %971 = vmatpush.bf16.msra.mxu0 %v565
  %972 = vmatmul.bf16.gmra.mxu0 %v962
  %v973 = vpop.f32.mrf.mxu0
  %v974 = vadd.f32 0.0, %v973
  %v975 = vpop.f32.mrf.mxu0
  %976 = vdwg.mxu0
  %v977 = vadd.f32 %v535, %v974
  %v978 = vxor.u32 %v977, 2147483648
  %v979 = vmul.f32 %v978, 1.442695
  %v980 = vpow.pop %v979
  %v981 = vadd.f32 %v980, 1.0
  %v982 = vrcp.pop %v981
  %v983 = vmul.f32 %v981, %v982
  %v984 = vsub.f32 1.0, %v983
  %v985 = vmul.f32 %v982, %v984
  %v986 = vadd.f32 %v982, %v985
  %vm987 = vweird.f32 %v981
  %vm988 = vweird.f32 %v982
  %vm989 = vmor %vm987, %vm988
  %v990 = vsel %vm989, %v982, %v986
  %v991 = vand.u32 2147483647, %v981
  %vm992 = vcmp.eq.f32.partialorder %v991, 8.507059e+37
  %v993 = vand.u32 %v981, 2147483648
  %v994 = vor.u32 1.1754944e-38, %v993
  %v995 = vsel %vm992, %v994, %v990
  %v996 = vmul.f32 1.0, %v995
  %v997 = vtanh.pop %v977
  %v998 = vmul.f32 %v996, %v885
  %1000 = vrot.lane.b32.xlu0 %v997, 64
  %v1001 = vpop.permute.xlu0 %1000
  %v1003 = vmul.f32 %v996, %v1001
  %1005 = vrot.lane.b32.xlu0 %v1003, 32
  %v1006 = vpop.permute.xlu0 %1005
  %v1008 = vadd.f32 %v998, %v1006
  %v1009 = vtanh.pop %v1008
  %1011 = vrot.lane.b32.xlu0 %v1009, 64
  %v1012 = vpop.permute.xlu0 %1011
  %v1014 = vmul.f32 %v996, %v1012
  %1016 = vst [vmem:[#allocation1] ss:$4 sm:$0xff] %v1014
  %v1017 = vld.sshfl [vmem:[#allocation1] sm:$0xff pattern:$0x73625140]
  %1018 = vrot.lane.b32.xlu0 %v1017, 32
  %v1019 = vpop.permute.xlu0 %1018
  %1022 = vrot.lane.b32.xlu0 %v956, 64
  %v1023 = vpop.permute.xlu0 %1022
  %v1025 = vsel %vm569, %v1019, %v1023
  %v1026 = vpack.c.bf16 %v1025, %v1025
  %v1028 = vsel %vm657, %v1026, 0
  %1030 = vmatpush.bf16.msra.mxu0 0
  %1031 = vmatpush.bf16.msra.mxu0 0
  %1032 = vmatpush.bf16.msra.mxu0 0
  %1033 = vmatpush.bf16.msra.mxu0 0
  %1034 = vmatpush.bf16.msra.mxu0 %v652
  %1035 = vmatpush.bf16.msra.mxu0 %v651
  %1036 = vmatpush.bf16.msra.mxu0 %v650
  %1037 = vmatpush.bf16.msra.mxu0 %v649
  %1038 = vmatmul.bf16.gmra.mxu0 %v1028
  %v1039 = vpop.f32.mrf.mxu0
  %v1040 = vadd.f32 %v632, %v1039
  %v1041 = vpop.f32.mrf.mxu0
  %1042 = vdwg.mxu0
  %v1043 = vxor.u32 %v1040, 2147483648
  %v1044 = vmul.f32 %v1043, 1.442695
  %v1045 = vpow.pop %v1044
  %v1046 = vadd.f32 %v1045, 1.0
  %v1047 = vrcp.pop %v1046
  %v1048 = vmul.f32 %v1046, %v1047
  %v1049 = vsub.f32 1.0, %v1048
  %v1050 = vmul.f32 %v1047, %v1049
  %v1051 = vadd.f32 %v1047, %v1050
  %vm1052 = vweird.f32 %v1046
  %vm1053 = vweird.f32 %v1047
  %vm1054 = vmor %vm1052, %vm1053
  %v1055 = vsel %vm1054, %v1047, %v1051
  %v1056 = vand.u32 2147483647, %v1046
  %vm1057 = vcmp.eq.f32.partialorder %v1056, 8.507059e+37
  %v1058 = vand.u32 %v1046, 2147483648
  %v1059 = vor.u32 1.1754944e-38, %v1058
  %v1060 = vsel %vm1057, %v1059, %v1055
  %v1061 = vmul.f32 1.0, %v1060
  %v1062 = vtanh.pop %v1040
  %v1063 = vmul.f32 %v1061, %v950
  %1065 = vrot.lane.b32.xlu0 %v1062, 64
  %v1066 = vpop.permute.xlu0 %1065
  %v1068 = vmul.f32 %v1061, %v1066
  %1070 = vrot.lane.b32.xlu0 %v1068, 32
  %v1071 = vpop.permute.xlu0 %1070
  %v1073 = vadd.f32 %v1063, %v1071
  %v1074 = vtanh.pop %v1073
  %1076 = vrot.lane.b32.xlu0 %v1074, 64
  %v1077 = vpop.permute.xlu0 %1076
  %v1079 = vmul.f32 %v1061, %v1077
  %v1080 = vpack.c.bf16 %v1014, %v1014
  %1082 = vrot.lane.b32.xlu0 %v1080, 32
  %v1083 = vpop.permute.xlu0 %1082
  %v1085 = vsel %vm569, %v1083, 0
  %1087 = vmatpush.bf16.msra.mxu0 0
  %1088 = vmatpush.bf16.msra.mxu0 0
  %1089 = vmatpush.bf16.msra.mxu0 0
  %1090 = vmatpush.bf16.msra.mxu0 0
  %1091 = vmatpush.bf16.msra.mxu0 0
  %1092 = vmatpush.bf16.msra.mxu0 0
  %1093 = vmatpush.bf16.msra.mxu0 %v566
  %1094 = vmatpush.bf16.msra.mxu0 %v565
  %1095 = vmatmul.bf16.gmra.mxu0 %v1085
  %v1096 = vpop.f32.mrf.mxu0
  %v1097 = vadd.f32 0.0, %v1096
  %v1098 = vpop.f32.mrf.mxu0
  %1099 = vdwg.mxu0
  %v1100 = vadd.f32 %v529, %v1097
  %v1101 = vxor.u32 %v1100, 2147483648
  %v1102 = vmul.f32 %v1101, 1.442695
  %v1103 = vpow.pop %v1102
  %v1104 = vadd.f32 %v1103, 1.0
  %v1105 = vrcp.pop %v1104
  %v1106 = vmul.f32 %v1104, %v1105
  %v1107 = vsub.f32 1.0, %v1106
  %v1108 = vmul.f32 %v1105, %v1107
  %v1109 = vadd.f32 %v1105, %v1108
  %vm1110 = vweird.f32 %v1104
  %vm1111 = vweird.f32 %v1105
  %vm1112 = vmor %vm1110, %vm1111
  %v1113 = vsel %vm1112, %v1105, %v1109
  %v1114 = vand.u32 2147483647, %v1104
  %vm1115 = vcmp.eq.f32.partialorder %v1114, 8.507059e+37
  %v1116 = vand.u32 %v1104, 2147483648
  %v1117 = vor.u32 1.1754944e-38, %v1116
  %v1118 = vsel %vm1115, %v1117, %v1113
  %v1119 = vmul.f32 1.0, %v1118
  %v1120 = vtanh.pop %v1100
  %v1121 = vmul.f32 %v1119, %v1008
  %1123 = vrot.lane.b32.xlu0 %v1120, 64
  %v1124 = vpop.permute.xlu0 %1123
  %v1126 = vmul.f32 %v1119, %v1124
  %1128 = vrot.lane.b32.xlu0 %v1126, 32
  %v1129 = vpop.permute.xlu0 %1128
  %v1131 = vadd.f32 %v1121, %v1129
  %v1132 = vtanh.pop %v1131
  %1134 = vrot.lane.b32.xlu0 %v1132, 64
  %v1135 = vpop.permute.xlu0 %1134
  %v1137 = vmul.f32 %v1119, %v1135
  %1139 = vst [vmem:[#allocation1] ss:$4 sm:$0xff] %v1137
  %v1140 = vld.sshfl [vmem:[#allocation1] sm:$0xff pattern:$0x73625140]
  %1141 = vrot.lane.b32.xlu0 %v1140, 32
  %v1142 = vpop.permute.xlu0 %1141
  %1145 = vrot.lane.b32.xlu0 %v1079, 64
  %v1146 = vpop.permute.xlu0 %1145
  %v1148 = vsel %vm569, %v1142, %v1146
  %v1149 = vpack.c.bf16 %v1148, %v1148
  %v1151 = vsel %vm657, %v1149, 0
  %1153 = vmatpush.bf16.msra.mxu0 0
  %1154 = vmatpush.bf16.msra.mxu0 0
  %1155 = vmatpush.bf16.msra.mxu0 0
  %1156 = vmatpush.bf16.msra.mxu0 0
  %1157 = vmatpush.bf16.msra.mxu0 %v652
  %1158 = vmatpush.bf16.msra.mxu0 %v651
  %1159 = vmatpush.bf16.msra.mxu0 %v650
  %1160 = vmatpush.bf16.msra.mxu0 %v649
  %1161 = vmatmul.bf16.gmra.mxu0 %v1151
  %v1162 = vpop.f32.mrf.mxu0
  %v1163 = vadd.f32 %v632, %v1162
  %v1164 = vpop.f32.mrf.mxu0
  %1165 = vdwg.mxu0
  %v1166 = vxor.u32 %v1163, 2147483648
  %v1167 = vmul.f32 %v1166, 1.442695
  %v1168 = vpow.pop %v1167
  %v1169 = vadd.f32 %v1168, 1.0
  %v1170 = vrcp.pop %v1169
  %v1171 = vmul.f32 %v1169, %v1170
  %v1172 = vsub.f32 1.0, %v1171
  %v1173 = vmul.f32 %v1170, %v1172
  %v1174 = vadd.f32 %v1170, %v1173
  %vm1175 = vweird.f32 %v1169
  %vm1176 = vweird.f32 %v1170
  %vm1177 = vmor %vm1175, %vm1176
  %v1178 = vsel %vm1177, %v1170, %v1174
  %v1179 = vand.u32 2147483647, %v1169
  %vm1180 = vcmp.eq.f32.partialorder %v1179, 8.507059e+37
  %v1181 = vand.u32 %v1169, 2147483648
  %v1182 = vor.u32 1.1754944e-38, %v1181
  %v1183 = vsel %vm1180, %v1182, %v1178
  %v1184 = vmul.f32 1.0, %v1183
  %v1185 = vtanh.pop %v1163
  %v1186 = vmul.f32 %v1184, %v1073
  %1188 = vrot.lane.b32.xlu0 %v1185, 64
  %v1189 = vpop.permute.xlu0 %1188
  %v1191 = vmul.f32 %v1184, %v1189
  %1193 = vrot.lane.b32.xlu0 %v1191, 32
  %v1194 = vpop.permute.xlu0 %1193
  %v1196 = vadd.f32 %v1186, %v1194
  %v1197 = vtanh.pop %v1196
  %1199 = vrot.lane.b32.xlu0 %v1197, 64
  %v1200 = vpop.permute.xlu0 %1199
  %v1202 = vmul.f32 %v1184, %v1200
  %v1203 = vpack.c.bf16 %v1137, %v1137
  %1205 = vrot.lane.b32.xlu0 %v1203, 32
  %v1206 = vpop.permute.xlu0 %1205
  %v1208 = vsel %vm569, %v1206, 0
  %1210 = vmatpush.bf16.msra.mxu0 0
  %1211 = vmatpush.bf16.msra.mxu0 0
  %1212 = vmatpush.bf16.msra.mxu0 0
  %1213 = vmatpush.bf16.msra.mxu0 0
  %1214 = vmatpush.bf16.msra.mxu0 0
  %1215 = vmatpush.bf16.msra.mxu0 0
  %1216 = vmatpush.bf16.msra.mxu0 %v566
  %1217 = vmatpush.bf16.msra.mxu0 %v565
  %1218 = vmatmul.bf16.gmra.mxu0 %v1208
  %v1219 = vpop.f32.mrf.mxu0
  %v1220 = vadd.f32 0.0, %v1219
  %v1221 = vpop.f32.mrf.mxu0
  %1222 = vdwg.mxu0
  %v1223 = vadd.f32 %v536, %v1220
  %v1224 = vxor.u32 %v1223, 2147483648
  %v1225 = vmul.f32 %v1224, 1.442695
  %v1226 = vpow.pop %v1225
  %v1227 = vadd.f32 %v1226, 1.0
  %v1228 = vrcp.pop %v1227
  %v1229 = vmul.f32 %v1227, %v1228
  %v1230 = vsub.f32 1.0, %v1229
  %v1231 = vmul.f32 %v1228, %v1230
  %v1232 = vadd.f32 %v1228, %v1231
  %vm1233 = vweird.f32 %v1227
  %vm1234 = vweird.f32 %v1228
  %vm1235 = vmor %vm1233, %vm1234
  %v1236 = vsel %vm1235, %v1228, %v1232
  %v1237 = vand.u32 2147483647, %v1227
  %vm1238 = vcmp.eq.f32.partialorder %v1237, 8.507059e+37
  %v1239 = vand.u32 %v1227, 2147483648
  %v1240 = vor.u32 1.1754944e-38, %v1239
  %v1241 = vsel %vm1238, %v1240, %v1236
  %v1242 = vmul.f32 1.0, %v1241
  %v1243 = vtanh.pop %v1223
  %v1244 = vmul.f32 %v1242, %v1131
  %1246 = vrot.lane.b32.xlu0 %v1243, 64
  %v1247 = vpop.permute.xlu0 %1246
  %v1249 = vmul.f32 %v1242, %v1247
  %1251 = vrot.lane.b32.xlu0 %v1249, 32
  %v1252 = vpop.permute.xlu0 %1251
  %v1254 = vadd.f32 %v1244, %v1252
  %v1255 = vtanh.pop %v1254
  %1257 = vrot.lane.b32.xlu0 %v1255, 64
  %v1258 = vpop.permute.xlu0 %1257
  %v1260 = vmul.f32 %v1242, %v1258
  %1262 = vst [vmem:[#allocation1] ss:$4 sm:$0xff] %v1260
  %v1263 = vld.sshfl [vmem:[#allocation1] sm:$0xff pattern:$0x73625140]
  %1264 = vrot.lane.b32.xlu0 %v1263, 32
  %v1265 = vpop.permute.xlu0 %1264
  %1268 = vrot.lane.b32.xlu0 %v1202, 64
  %v1269 = vpop.permute.xlu0 %1268
  %v1271 = vsel %vm569, %v1265, %v1269
  %v1272 = vpack.c.bf16 %v1271, %v1271
  %v1274 = vsel %vm657, %v1272, 0
  %1276 = vmatpush.bf16.msra.mxu0 0
  %1277 = vmatpush.bf16.msra.mxu0 0
  %1278 = vmatpush.bf16.msra.mxu0 0
  %1279 = vmatpush.bf16.msra.mxu0 0
  %1280 = vmatpush.bf16.msra.mxu0 %v652
  %1281 = vmatpush.bf16.msra.mxu0 %v651
  %1282 = vmatpush.bf16.msra.mxu0 %v650
  %1283 = vmatpush.bf16.msra.mxu0 %v649
  %1284 = vmatmul.bf16.gmra.mxu0 %v1274
  %v1285 = vpop.f32.mrf.mxu0
  %v1286 = vadd.f32 %v632, %v1285
  %v1287 = vpop.f32.mrf.mxu0
  %1288 = vdwg.mxu0
  %v1289 = vxor.u32 %v1286, 2147483648
  %v1290 = vmul.f32 %v1289, 1.442695
  %v1291 = vpow.pop %v1290
  %v1292 = vadd.f32 %v1291, 1.0
  %v1293 = vrcp.pop %v1292
  %v1294 = vmul.f32 %v1292, %v1293
  %v1295 = vsub.f32 1.0, %v1294
  %v1296 = vmul.f32 %v1293, %v1295
  %v1297 = vadd.f32 %v1293, %v1296
  %vm1298 = vweird.f32 %v1292
  %vm1299 = vweird.f32 %v1293
  %vm1300 = vmor %vm1298, %vm1299
  %v1301 = vsel %vm1300, %v1293, %v1297
  %v1302 = vand.u32 2147483647, %v1292
  %vm1303 = vcmp.eq.f32.partialorder %v1302, 8.507059e+37
  %v1304 = vand.u32 %v1292, 2147483648
  %v1305 = vor.u32 1.1754944e-38, %v1304
  %v1306 = vsel %vm1303, %v1305, %v1301
  %v1307 = vmul.f32 1.0, %v1306
  %v1308 = vtanh.pop %v1286
  %v1309 = vmul.f32 %v1307, %v1196
  %1311 = vrot.lane.b32.xlu0 %v1308, 64
  %v1312 = vpop.permute.xlu0 %1311
  %v1314 = vmul.f32 %v1307, %v1312
  %1316 = vrot.lane.b32.xlu0 %v1314, 32
  %v1317 = vpop.permute.xlu0 %1316
  %v1319 = vadd.f32 %v1309, %v1317
  %v1320 = vtanh.pop %v1319
  %1322 = vrot.lane.b32.xlu0 %v1320, 64
  %v1323 = vpop.permute.xlu0 %1322
  %v1325 = vmul.f32 %v1307, %v1323
  %v1326 = vpack.c.bf16 %v1260, %v1260
  %1328 = vrot.lane.b32.xlu0 %v1326, 32
  %v1329 = vpop.permute.xlu0 %1328
  %v1331 = vsel %vm569, %v1329, 0
  %1333 = vmatpush.bf16.msra.mxu0 0
  %1334 = vmatpush.bf16.msra.mxu0 0
  %1335 = vmatpush.bf16.msra.mxu0 0
  %1336 = vmatpush.bf16.msra.mxu0 0
  %1337 = vmatpush.bf16.msra.mxu0 0
  %1338 = vmatpush.bf16.msra.mxu0 0
  %1339 = vmatpush.bf16.msra.mxu0 %v566
  %1340 = vmatpush.bf16.msra.mxu0 %v565
  %1341 = vmatmul.bf16.gmra.mxu0 %v1331
  %v1342 = vpop.f32.mrf.mxu0
  %v1343 = vadd.f32 0.0, %v1342
  %v1344 = vpop.f32.mrf.mxu0
  %1345 = vdwg.mxu0
  %v1346 = vadd.f32 %v537, %v1343
  %v1347 = vxor.u32 %v1346, 2147483648
  %v1348 = vmul.f32 %v1347, 1.442695
  %v1349 = vpow.pop %v1348
  %v1350 = vadd.f32 %v1349, 1.0
  %v1351 = vrcp.pop %v1350
  %v1352 = vmul.f32 %v1350, %v1351
  %v1353 = vsub.f32 1.0, %v1352
  %v1354 = vmul.f32 %v1351, %v1353
  %v1355 = vadd.f32 %v1351, %v1354
  %vm1356 = vweird.f32 %v1350
  %vm1357 = vweird.f32 %v1351
  %vm1358 = vmor %vm1356, %vm1357
  %v1359 = vsel %vm1358, %v1351, %v1355
  %v1360 = vand.u32 2147483647, %v1350
  %vm1361 = vcmp.eq.f32.partialorder %v1360, 8.507059e+37
  %v1362 = vand.u32 %v1350, 2147483648
  %v1363 = vor.u32 1.1754944e-38, %v1362
  %v1364 = vsel %vm1361, %v1363, %v1359
  %v1365 = vmul.f32 1.0, %v1364
  %v1366 = vtanh.pop %v1346
  %v1367 = vmul.f32 %v1365, %v1254
  %1369 = vrot.lane.b32.xlu0 %v1366, 64
  %v1370 = vpop.permute.xlu0 %1369
  %v1372 = vmul.f32 %v1365, %v1370
  %1374 = vrot.lane.b32.xlu0 %v1372, 32
  %v1375 = vpop.permute.xlu0 %1374
  %v1377 = vadd.f32 %v1367, %v1375
  %v1378 = vtanh.pop %v1377
  %1380 = vrot.lane.b32.xlu0 %v1378, 64
  %v1381 = vpop.permute.xlu0 %1380
  %v1383 = vmul.f32 %v1365, %v1381
  %1385 = vst [vmem:[#allocation1] ss:$4 sm:$0xff] %v1383
  %v1386 = vld.sshfl [vmem:[#allocation1] sm:$0xff pattern:$0x73625140]
  %1387 = vrot.lane.b32.xlu0 %v1386, 32
  %v1388 = vpop.permute.xlu0 %1387
  %1391 = vrot.lane.b32.xlu0 %v1325, 64
  %v1392 = vpop.permute.xlu0 %1391
  %v1394 = vsel %vm569, %v1388, %v1392
  %v1395 = vpack.c.bf16 %v1394, %v1394
  %v1397 = vsel %vm657, %v1395, 0
  %1399 = vmatpush.bf16.msra.mxu0 0
  %1400 = vmatpush.bf16.msra.mxu0 0
  %1401 = vmatpush.bf16.msra.mxu0 0
  %1402 = vmatpush.bf16.msra.mxu0 0
  %1403 = vmatpush.bf16.msra.mxu0 %v652
  %1404 = vmatpush.bf16.msra.mxu0 %v651
  %1405 = vmatpush.bf16.msra.mxu0 %v650
  %1406 = vmatpush.bf16.msra.mxu0 %v649
  %1407 = vmatmul.bf16.gmra.mxu0 %v1397
  %v1408 = vpop.f32.mrf.mxu0
  %v1409 = vadd.f32 %v632, %v1408
  %v1410 = vpop.f32.mrf.mxu0
  %1411 = vdwg.mxu0
  %v1412 = vxor.u32 %v1409, 2147483648
  %v1413 = vmul.f32 %v1412, 1.442695
  %v1414 = vpow.pop %v1413
  %v1415 = vadd.f32 %v1414, 1.0
  %v1416 = vrcp.pop %v1415
  %v1417 = vmul.f32 %v1415, %v1416
  %v1418 = vsub.f32 1.0, %v1417
  %v1419 = vmul.f32 %v1416, %v1418
  %v1420 = vadd.f32 %v1416, %v1419
  %vm1421 = vweird.f32 %v1415
  %vm1422 = vweird.f32 %v1416
  %vm1423 = vmor %vm1421, %vm1422
  %v1424 = vsel %vm1423, %v1416, %v1420
  %v1425 = vand.u32 2147483647, %v1415
  %vm1426 = vcmp.eq.f32.partialorder %v1425, 8.507059e+37
  %v1427 = vand.u32 %v1415, 2147483648
  %v1428 = vor.u32 1.1754944e-38, %v1427
  %v1429 = vsel %vm1426, %v1428, %v1424
  %v1430 = vmul.f32 1.0, %v1429
  %v1431 = vtanh.pop %v1409
  %v1432 = vmul.f32 %v1430, %v1319
  %1434 = vrot.lane.b32.xlu0 %v1431, 64
  %v1435 = vpop.permute.xlu0 %1434
  %v1437 = vmul.f32 %v1430, %v1435
  %1439 = vrot.lane.b32.xlu0 %v1437, 32
  %v1440 = vpop.permute.xlu0 %1439
  %v1442 = vadd.f32 %v1432, %v1440
  %v1443 = vtanh.pop %v1442
  %1445 = vrot.lane.b32.xlu0 %v1443, 64
  %v1446 = vpop.permute.xlu0 %1445
  %v1448 = vmul.f32 %v1430, %v1446
  %v1449 = vpack.c.bf16 %v1383, %v1383
  %1451 = vrot.lane.b32.xlu0 %v1449, 32
  %v1452 = vpop.permute.xlu0 %1451
  %v1454 = vsel %vm569, %v1452, 0
  %1456 = vmatpush.bf16.msra.mxu0 0
  %1457 = vmatpush.bf16.msra.mxu0 0
  %1458 = vmatpush.bf16.msra.mxu0 0
  %1459 = vmatpush.bf16.msra.mxu0 0
  %1460 = vmatpush.bf16.msra.mxu0 0
  %1461 = vmatpush.bf16.msra.mxu0 0
  %1462 = vmatpush.bf16.msra.mxu0 %v566
  %1463 = vmatpush.bf16.msra.mxu0 %v565
  %1464 = vmatmul.bf16.gmra.mxu0 %v1454
  %v1465 = vpop.f32.mrf.mxu0
  %v1466 = vadd.f32 0.0, %v1465
  %v1467 = vpop.f32.mrf.mxu0
  %1468 = vdwg.mxu0
  %v1469 = vadd.f32 %v538, %v1466
  %v1470 = vxor.u32 %v1469, 2147483648
  %v1471 = vmul.f32 %v1470, 1.442695
  %v1472 = vpow.pop %v1471
  %v1473 = vadd.f32 %v1472, 1.0
  %v1474 = vrcp.pop %v1473
  %v1475 = vmul.f32 %v1473, %v1474
  %v1476 = vsub.f32 1.0, %v1475
  %v1477 = vmul.f32 %v1474, %v1476
  %v1478 = vadd.f32 %v1474, %v1477
  %vm1479 = vweird.f32 %v1473
  %vm1480 = vweird.f32 %v1474
  %vm1481 = vmor %vm1479, %vm1480
  %v1482 = vsel %vm1481, %v1474, %v1478
  %v1483 = vand.u32 2147483647, %v1473
  %vm1484 = vcmp.eq.f32.partialorder %v1483, 8.507059e+37
  %v1485 = vand.u32 %v1473, 2147483648
  %v1486 = vor.u32 1.1754944e-38, %v1485
  %v1487 = vsel %vm1484, %v1486, %v1482
  %v1488 = vmul.f32 1.0, %v1487
  %v1489 = vtanh.pop %v1469
  %v1490 = vmul.f32 %v1488, %v1377
  %1492 = vrot.lane.b32.xlu0 %v1489, 64
  %v1493 = vpop.permute.xlu0 %1492
  %v1495 = vmul.f32 %v1488, %v1493
  %1497 = vrot.lane.b32.xlu0 %v1495, 32
  %v1498 = vpop.permute.xlu0 %1497
  %v1500 = vadd.f32 %v1490, %v1498
  %v1501 = vtanh.pop %v1500
  %1503 = vrot.lane.b32.xlu0 %v1501, 64
  %v1504 = vpop.permute.xlu0 %1503
  %v1506 = vmul.f32 %v1488, %v1504
  %1508 = vst [vmem:[#allocation1] ss:$4 sm:$0xff] %v1506
  %v1509 = vld.sshfl [vmem:[#allocation1] sm:$0xff pattern:$0x73625140]
  %1510 = vrot.lane.b32.xlu0 %v1509, 32
  %v1511 = vpop.permute.xlu0 %1510
  %1514 = vrot.lane.b32.xlu0 %v1448, 64
  %v1515 = vpop.permute.xlu0 %1514
  %v1517 = vsel %vm569, %v1511, %v1515
  %v1518 = vpack.c.bf16 %v1517, %v1517
  %v1520 = vsel %vm657, %v1518, 0
  %1522 = vmatpush.bf16.msra.mxu0 0
  %1523 = vmatpush.bf16.msra.mxu0 0
  %1524 = vmatpush.bf16.msra.mxu0 0
  %1525 = vmatpush.bf16.msra.mxu0 0
  %1526 = vmatpush.bf16.msra.mxu0 %v652
  %1527 = vmatpush.bf16.msra.mxu0 %v651
  %1528 = vmatpush.bf16.msra.mxu0 %v650
  %1529 = vmatpush.bf16.msra.mxu0 %v649
  %1530 = vmatmul.bf16.gmra.mxu0 %v1520
  %v1531 = vpop.f32.mrf.mxu0
  %v1532 = vadd.f32 %v632, %v1531
  %v1533 = vpop.f32.mrf.mxu0
  %1534 = vdwg.mxu0
  %v1535 = vxor.u32 %v1532, 2147483648
  %v1536 = vmul.f32 %v1535, 1.442695
  %v1537 = vpow.pop %v1536
  %v1538 = vadd.f32 %v1537, 1.0
  %v1539 = vrcp.pop %v1538
  %v1540 = vmul.f32 %v1538, %v1539
  %v1541 = vsub.f32 1.0, %v1540
  %v1542 = vmul.f32 %v1539, %v1541
  %v1543 = vadd.f32 %v1539, %v1542
  %vm1544 = vweird.f32 %v1538
  %vm1545 = vweird.f32 %v1539
  %vm1546 = vmor %vm1544, %vm1545
  %v1547 = vsel %vm1546, %v1539, %v1543
  %v1548 = vand.u32 2147483647, %v1538
  %vm1549 = vcmp.eq.f32.partialorder %v1548, 8.507059e+37
  %v1550 = vand.u32 %v1538, 2147483648
  %v1551 = vor.u32 1.1754944e-38, %v1550
  %v1552 = vsel %vm1549, %v1551, %v1547
  %v1553 = vmul.f32 1.0, %v1552
  %v1554 = vtanh.pop %v1532
  %v1555 = vmul.f32 %v1553, %v1442
  %1557 = vrot.lane.b32.xlu0 %v1554, 64
  %v1558 = vpop.permute.xlu0 %1557
  %v1560 = vmul.f32 %v1553, %v1558
  %1562 = vrot.lane.b32.xlu0 %v1560, 32
  %v1563 = vpop.permute.xlu0 %1562
  %v1565 = vadd.f32 %v1555, %v1563
  %v1566 = vtanh.pop %v1565
  %1568 = vrot.lane.b32.xlu0 %v1566, 64
  %v1569 = vpop.permute.xlu0 %1568
  %v1571 = vmul.f32 %v1553, %v1569
  %v1572 = vpack.c.bf16 %v434, %v434
  %v1573 = vpack.c.bf16 %v443, %v443
  %v1574 = vld [vmem:[%s1 + $0xb0] sm:$0xf]
  %v1575 = vld [vmem:[%s1 + $0xb4] sm:$0xf]
  %v1576 = vld [vmem:[%s1 + $0xb8] sm:$0xf]
  %v1577 = vld [vmem:[%s1 + $0xbc] sm:$0xf]
  %v1578 = vld [vmem:[%s1 + $0xc0] sm:$0xf]
  %v1579 = vld [vmem:[%s1 + $0xc4] sm:$0xf]
  %v1580 = vld [vmem:[%s1 + $0xc8] sm:$0xf]
  %v1581 = vld [vmem:[%s1 + $0xcc] sm:$0xf]
  %v1582 = vld [vmem:[%s1 + $0xd0] sm:$0xf]
  %v1583 = vld [vmem:[%s1 + $0xd4] sm:$0xf]
  %v1584 = vld [vmem:[%s1 + $0xd8] sm:$0xf]
  %v1585 = vld [vmem:[%s1 + $0xdc] sm:$0xf]
  %v1586 = vld [vmem:[%s1 + $0xe0] sm:$0xf]
  %v1587 = vld [vmem:[%s1 + $0xe4] sm:$0xf]
  %v1588 = vld [vmem:[%s1 + $0xe8] sm:$0xf]
  %v1589 = vld [vmem:[%s1 + $0xec] sm:$0xf]
  %v1590 = vpack.c.bf16 %v1571, %v1571
  %v1591 = vld [vmem:[%s1 + $0xf0] sm:$0xf]
  %v1592 = vld [vmem:[%s1 + $0xf4] sm:$0xf]
  %v1593 = vld [vmem:[%s1 + $0xf8] sm:$0xf]
  %v1594 = vld [vmem:[%s1 + $0xfc] sm:$0xf]
  %1596 = vrot.lane.b32.xlu0 %v1590, 32
  %v1597 = vpop.permute.xlu0 %1596
  %v1602 = vunpack.c.l.b16 %v1591
  %v1603 = vunpack.c.l.b16 %v1592
  %v1604 = vunpack.c.l.b16 %v1593
  %v1605 = vunpack.c.l.b16 %v1594
  %v1606 = vpack.c.b16 %v1603, %v1602
  %v1607 = vpack.c.b16 %v1605, %v1604
  %v1611 = vsel %vm569, %v1597, 0
  %1613 = vmatpush.bf16.msra.mxu0 0
  %1614 = vmatpush.bf16.msra.mxu0 0
  %1615 = vmatpush.bf16.msra.mxu0 0
  %1616 = vmatpush.bf16.msra.mxu0 0
  %1617 = vmatpush.bf16.msra.mxu0 0
  %1618 = vmatpush.bf16.msra.mxu0 0
  %1619 = vmatpush.bf16.msra.mxu0 %v1607
  %1620 = vmatpush.bf16.msra.mxu0 %v1606
  %1621 = vmatmul.bf16.gmra.mxu0 %v1611
  %v1622 = vpop.f32.mrf.mxu0
  %v1623 = vadd.f32 0.0, %v1622
  %v1624 = vpop.f32.mrf.mxu0
  %1625 = vdwg.mxu0
  %v1628 = vunpack.c.l.b16 %v1572
  %v1629 = vunpack.c.l.b16 %v1573
  %vm1630 = vcmask 1041409
  %v1631 = vsel %vm1630, %v1629, %v1628
  %v1632 = vpack.c.b16 %v1631, %v1631
  %v1650 = vunpack.c.l.b16 %v1574
  %v1651 = vunpack.c.l.b16 %v1575
  %v1652 = vunpack.c.l.b16 %v1576
  %v1653 = vunpack.c.l.b16 %v1577
  %v1654 = vunpack.c.l.b16 %v1578
  %v1655 = vunpack.c.l.b16 %v1579
  %v1656 = vunpack.c.l.b16 %v1580
  %v1657 = vunpack.c.l.b16 %v1581
  %v1658 = vunpack.c.l.b16 %v1582
  %v1659 = vunpack.c.l.b16 %v1583
  %v1660 = vunpack.c.l.b16 %v1584
  %v1661 = vunpack.c.l.b16 %v1585
  %v1662 = vunpack.c.l.b16 %v1586
  %v1663 = vunpack.c.l.b16 %v1587
  %v1664 = vunpack.c.l.b16 %v1588
  %v1665 = vunpack.c.l.b16 %v1589
  %v1666 = vpack.c.b16 %v1651, %v1650
  %v1667 = vpack.c.b16 %v1653, %v1652
  %v1668 = vpack.c.b16 %v1655, %v1654
  %v1669 = vpack.c.b16 %v1657, %v1656
  %v1670 = vpack.c.b16 %v1659, %v1658
  %v1671 = vpack.c.b16 %v1661, %v1660
  %v1672 = vpack.c.b16 %v1663, %v1662
  %v1673 = vpack.c.b16 %v1665, %v1664
  %1682 = vmatpush.bf16.msra.mxu0 %v1673
  %1683 = vmatpush.bf16.msra.mxu0 %v1672
  %1684 = vmatpush.bf16.msra.mxu0 %v1671
  %1685 = vmatpush.bf16.msra.mxu0 %v1670
  %1686 = vmatpush.bf16.msra.mxu0 %v1669
  %1687 = vmatpush.bf16.msra.mxu0 %v1668
  %1688 = vmatpush.bf16.msra.mxu0 %v1667
  %1689 = vmatpush.bf16.msra.mxu0 %v1666
  %1690 = vmatmul.bf16.gmra.mxu0 %v1632
  %v1691 = vpop.f32.mrf.mxu0
  %v1692 = vadd.f32 %v1623, %v1691
  %v1693 = vpop.f32.mrf.mxu0
  %1694 = vdwg.mxu0
  %v1695 = vperm.slane %v19, 0
  %v1696 = vadd.f32 %v1692, %v1695
  %v1697 = vmax.f32 %v1696, 0.0
  %v1698 = vpack.c.bf16 %v1697, %v1697
  %v1699 = vld [vmem:[%s1 + $0x100] sm:$0xf]
  %v1700 = vld [vmem:[%s1 + $0x104] sm:$0xf]
  %v1701 = vld [vmem:[%s1 + $0x108] sm:$0xf]
  %v1702 = vld [vmem:[%s1 + $0x10c] sm:$0xf]
  %v1703 = vld [vmem:[%s1 + $0x110] sm:$0xf]
  %v1704 = vld [vmem:[%s1 + $0x114] sm:$0xf]
  %v1705 = vld [vmem:[%s1 + $0x118] sm:$0xf]
  %v1706 = vld [vmem:[%s1 + $0x11c] sm:$0xf]
  %v1707 = vld [vmem:[%s1 + $0x120] sm:$0xf]
  %v1708 = vld [vmem:[%s1 + $0x124] sm:$0xf]
  %v1709 = vld [vmem:[%s1 + $0x128] sm:$0xf]
  %v1710 = vld [vmem:[%s1 + $0x12c] sm:$0xf]
  %v1711 = vld [vmem:[%s1 + $0x130] sm:$0xf]
  %v1712 = vld [vmem:[%s1 + $0x134] sm:$0xf]
  %v1713 = vld [vmem:[%s1 + $0x138] sm:$0xf]
  %v1714 = vld [vmem:[%s1 + $0x13c] sm:$0xf]
  %v1715 = vperm.slane %v20, 0
  %v1732 = vunpack.c.l.b16 %v1699
  %v1733 = vunpack.c.l.b16 %v1700
  %v1734 = vunpack.c.l.b16 %v1701
  %v1735 = vunpack.c.l.b16 %v1702
  %v1736 = vunpack.c.l.b16 %v1703
  %v1737 = vunpack.c.l.b16 %v1704
  %v1738 = vunpack.c.l.b16 %v1705
  %v1739 = vunpack.c.l.b16 %v1706
  %v1740 = vunpack.c.l.b16 %v1707
  %v1741 = vunpack.c.l.b16 %v1708
  %v1742 = vunpack.c.l.b16 %v1709
  %v1743 = vunpack.c.l.b16 %v1710
  %v1744 = vunpack.c.l.b16 %v1711
  %v1745 = vunpack.c.l.b16 %v1712
  %v1746 = vunpack.c.l.b16 %v1713
  %v1747 = vunpack.c.l.b16 %v1714
  %v1748 = vpack.c.b16 %v1733, %v1732
  %v1749 = vpack.c.b16 %v1735, %v1734
  %v1750 = vpack.c.b16 %v1737, %v1736
  %v1751 = vpack.c.b16 %v1739, %v1738
  %v1752 = vpack.c.b16 %v1741, %v1740
  %v1753 = vpack.c.b16 %v1743, %v1742
  %v1754 = vpack.c.b16 %v1745, %v1744
  %v1755 = vpack.c.b16 %v1747, %v1746
  %1764 = vmatpush.bf16.msra.mxu0 %v1755
  %1765 = vmatpush.bf16.msra.mxu0 %v1754
  %1766 = vmatpush.bf16.msra.mxu0 %v1753
  %1767 = vmatpush.bf16.msra.mxu0 %v1752
  %1768 = vmatpush.bf16.msra.mxu0 %v1751
  %1769 = vmatpush.bf16.msra.mxu0 %v1750
  %1770 = vmatpush.bf16.msra.mxu0 %v1749
  %1771 = vmatpush.bf16.msra.mxu0 %v1748
  %1772 = vmatmul.bf16.gmra.mxu0 %v1698
  %v1773 = vpop.f32.mrf.mxu0
  %v1774 = vadd.f32 %v1715, %v1773
  %v1775 = vpop.f32.mrf.mxu0
  %1776 = vdwg.mxu0
  %v1777 = vmax.f32 %v1774, 0.0
  %v1778 = vperm.slane %v21, 0
  %v1779 = vmul.f32 %v1777, %v1778
  %vm1780 = vcmask 1041408
  %v1781 = vsel %vm1780, %v1779, 0.0
  %1782 = vadd.xlane.f32.xlu0 %v1781
  %v1783 = vpop.xlane.xlu0 %1782
  %v1784 = vperm.slane %v22, 0
  %v1785 = vadd.f32 %v1783, %v1784
  %vm1786 = vcmask 1024
  %1787 = vst.msk [vmem:[%s3] sm:$0x3] %vm1786, %v1785
  // Predicated region
  $region14: #{stacn_forward.1} parent=0 // pred_check
    _
  $region15: #{stacn_forward.1} parent=0 // pred_check_branch
    %1789 = sbr.rel (0) target = $region17
  $region16: #{stacn_forward.1} parent=0 // pred_region
    _
  $region17: #{stacn_forward.1} parent=0 // pred_fallthru
    _
  // Predicated region
  $region18: #{stacn_forward.1} parent=0 // pred_check
    _
  $region19: #{stacn_forward.1} parent=0 // pred_check_branch
    %1791 = sbr.rel (0) target = $region21
  $region20: #{stacn_forward.1} parent=0 // pred_region
    _
  $region21: #{stacn_forward.1} parent=0 // pred_fallthru
    _

</llo_original>
